<compile_context>
chip_gen: v7x
topology: tpu7x:2x2x1
jax: 0.10.0
libtpu: 0.0.40
codegen_flags: <defaults>
</compile_context>

<pallas_src>
import functools
import math

import jax
import jax.numpy as jnp
from jax.experimental import pallas as pl
from jax.experimental.pallas import tpu as pltpu

COMPUTE_DTYPE = jnp.bfloat16   # encoder matmul storage dtype (accumulation stays f32)


# -----------------------------------------------------------------------------
# small helpers
# -----------------------------------------------------------------------------
def _pick_tile(m, candidates=(512, 256, 128)):
    """Largest aligned tile that divides m; fall back to the full extent."""
    for c in candidates:
        if m % c == 0:
            return c
    return m


def _erf_f32(x):
    # Abramowitz & Stegun 7.1.26 polynomial erf, |err| < 1.5e-7 -> exact at working
    # precision.  Uses only exp/mul/add so it is guaranteed to lower on Mosaic.
    a1, a2, a3, a4, a5 = 0.254829592, -0.284496736, 1.421413741, -1.453152027, 1.061405429
    p = 0.3275911
    ax = jnp.abs(x)
    t = 1.0 / (1.0 + p * ax)
    poly = t * (a1 + t * (a2 + t * (a3 + t * (a4 + t * a5))))
    y = 1.0 - poly * jnp.exp(-ax * ax)
    return jnp.where(x >= 0, y, -y)


def _gelu_exact(x):
    # BERT uses exact (erf) GELU.
    return 0.5 * x * (1.0 + _erf_f32(x * 0.7071067811865476))


def _ln(x, g, b, eps):
    mean = jnp.mean(x, axis=-1, keepdims=True)
    var = jnp.mean((x - mean) ** 2, axis=-1, keepdims=True)
    return (x - mean) * jax.lax.rsqrt(var + eps) * g + b


# -----------------------------------------------------------------------------
# Pallas kernels
# -----------------------------------------------------------------------------
def _dense_kernel(x_ref, w_ref, b_ref, o_ref):
    y = jnp.dot(x_ref[...], w_ref[...], preferred_element_type=jnp.float32)
    y = y + b_ref[...].astype(jnp.float32)
    o_ref[...] = y.astype(o_ref.dtype)


def dense(x, w, b, out_dtype=None):
    """y = x @ w + b.  x:(M,K), w:(K,N), b:(N,).  Tiled/pipelined over M."""
    M, K = x.shape
    N = w.shape[1]
    tm = _pick_tile(M)
    out_dtype = out_dtype or x.dtype
    # TODO(synk): at BERT-base scale also tile N/K with an f32 VMEM accumulator; here the
    # full (K,N) weight comfortably fits VMEM so it stays resident per M-tile.
    return pl.pallas_call(
        _dense_kernel,
        out_shape=jax.ShapeDtypeStruct((M, N), out_dtype),
        grid=(M // tm,),
        in_specs=[
            pl.BlockSpec((tm, K), lambda i: (i, 0)),
            pl.BlockSpec((K, N), lambda i: (0, 0)),
            pl.BlockSpec((1, N), lambda i: (0, 0)),
        ],
        out_specs=pl.BlockSpec((tm, N), lambda i: (i, 0)),
        compiler_params=pltpu.CompilerParams(dimension_semantics=("parallel",)),
    )(x, w, b.reshape(1, N))


def _layernorm_kernel(x_ref, g_ref, b_ref, o_ref, *, eps):
    x = x_ref[...].astype(jnp.float32)
    y = _ln(x, g_ref[...].astype(jnp.float32), b_ref[...].astype(jnp.float32), eps)
    o_ref[...] = y.astype(o_ref.dtype)


def layernorm(x, gamma, beta, eps, out_dtype=None):
    M, H = x.shape
    tm = _pick_tile(M)
    out_dtype = out_dtype or x.dtype
    return pl.pallas_call(
        functools.partial(_layernorm_kernel, eps=eps),
        out_shape=jax.ShapeDtypeStruct((M, H), out_dtype),
        grid=(M // tm,),
        in_specs=[
            pl.BlockSpec((tm, H), lambda i: (i, 0)),
            pl.BlockSpec((1, H), lambda i: (0, 0)),
            pl.BlockSpec((1, H), lambda i: (0, 0)),
        ],
        out_specs=pl.BlockSpec((tm, H), lambda i: (i, 0)),
        compiler_params=pltpu.CompilerParams(dimension_semantics=("parallel",)),
    )(x, gamma.reshape(1, H), beta.reshape(1, H))


def _attn_block_kernel(qkv_ref, mask_ref, res_ref, wo_ref, bo_ref, g_ref, b_ref,
                       o_ref, *, num_heads, head_dim, scale, eps):
    """Per-batch fused: multi-head attention -> out-proj -> +residual -> LayerNorm."""
    H = num_heads * head_dim
    qkv = qkv_ref[0].astype(jnp.float32)      # (S, 3H)
    mask = mask_ref[0]                        # (1, S) additive mask, f32
    ctx_heads = []
    for h in range(num_heads):                # static head loop, column slices (no transposes)
        q = qkv[:, h * head_dim:(h + 1) * head_dim]
        k = qkv[:, H + h * head_dim:H + (h + 1) * head_dim]
        v = qkv[:, 2 * H + h * head_dim:2 * H + (h + 1) * head_dim]
        s = jax.lax.dot_general(q, k, (((1,), (1,)), ((), ())),
                                preferred_element_type=jnp.float32) * scale + mask
        s = s - jnp.max(s, axis=-1, keepdims=True)
        p = jnp.exp(s)
        p = p * pl.reciprocal(jnp.sum(p, axis=-1, keepdims=True), approx=True)
        ctx_heads.append(jnp.dot(p, v, preferred_element_type=jnp.float32))
    ctx = jnp.concatenate(ctx_heads, axis=-1)  # (S, H)
    attn_out = (jnp.dot(ctx.astype(wo_ref.dtype), wo_ref[...],
                        preferred_element_type=jnp.float32)
                + bo_ref[...].astype(jnp.float32))
    x = res_ref[0].astype(jnp.float32) + attn_out
    y = _ln(x, g_ref[...].astype(jnp.float32), b_ref[...].astype(jnp.float32), eps)
    o_ref[0] = y.astype(o_ref.dtype)


def attention_block(qkv, add_mask, residual, wo, bo, ln_g, ln_b, *, num_heads, eps):
    """qkv:(B,S,3H) residual:(B,S,H) add_mask:(B,1,S) f32 -> LN(residual + attn_out)."""
    B, S, three_h = qkv.shape
    H = three_h // 3
    dh = H // num_heads
    scale = 1.0 / math.sqrt(dh)               # Python float -> safe to close over
    kernel = functools.partial(_attn_block_kernel, num_heads=num_heads,
                               head_dim=dh, scale=scale, eps=eps)
    # TODO(synk): for long sequences (S >= 1-2K) convert to a KV-blocked flash-attention
    # (online softmax) instead of materializing the full (S,S) score matrix per head.
    return pl.pallas_call(
        kernel,
        out_shape=jax.ShapeDtypeStruct((B, S, H), residual.dtype),
        grid=(B,),
        in_specs=[
            pl.BlockSpec((1, S, three_h), lambda b: (b, 0, 0)),
            pl.BlockSpec((1, 1, S), lambda b: (b, 0, 0)),
            pl.BlockSpec((1, S, H), lambda b: (b, 0, 0)),
            pl.BlockSpec((H, H), lambda b: (0, 0)),
            pl.BlockSpec((1, H), lambda b: (0, 0)),
            pl.BlockSpec((1, H), lambda b: (0, 0)),
            pl.BlockSpec((1, H), lambda b: (0, 0)),
        ],
        out_specs=pl.BlockSpec((1, S, H), lambda b: (b, 0, 0)),
        compiler_params=pltpu.CompilerParams(dimension_semantics=("parallel",)),
    )(qkv, add_mask, residual, wo, bo.reshape(1, H), ln_g.reshape(1, H), ln_b.reshape(1, H))


def _ffn_block_kernel(x_ref, w1_ref, b1_ref, w2_ref, b2_ref, g_ref, b_ref, o_ref, *, eps):
    """Fused: up-proj -> exact GELU -> down-proj -> +residual -> LayerNorm."""
    x = x_ref[...]
    u = jnp.dot(x, w1_ref[...], preferred_element_type=jnp.float32) \
        + b1_ref[...].astype(jnp.float32)
    u = _gelu_exact(u)
    y = jnp.dot(u.astype(w2_ref.dtype), w2_ref[...], preferred_element_type=jnp.float32) \
        + b2_ref[...].astype(jnp.float32)
    z = x.astype(jnp.float32) + y
    o_ref[...] = _ln(z, g_ref[...].astype(jnp.float32), b_ref[...].astype(jnp.float32),
                     eps).astype(o_ref.dtype)


def ffn_block(x, w1, b1, w2, b2, ln_g, ln_b, eps):
    M, H = x.shape
    I = w1.shape[1]
    tm = _pick_tile(M)
    return pl.pallas_call(
        functools.partial(_ffn_block_kernel, eps=eps),
        out_shape=jax.ShapeDtypeStruct((M, H), x.dtype),
        grid=(M // tm,),
        in_specs=[
            pl.BlockSpec((tm, H), lambda i: (i, 0)),
            pl.BlockSpec((H, I), lambda i: (0, 0)),
            pl.BlockSpec((1, I), lambda i: (0, 0)),
            pl.BlockSpec((I, H), lambda i: (0, 0)),
            pl.BlockSpec((1, H), lambda i: (0, 0)),
            pl.BlockSpec((1, H), lambda i: (0, 0)),
            pl.BlockSpec((1, H), lambda i: (0, 0)),
        ],
        out_specs=pl.BlockSpec((tm, H), lambda i: (i, 0)),
        compiler_params=pltpu.CompilerParams(dimension_semantics=("parallel",)),
    )(x, w1, b1.reshape(1, I), w2, b2.reshape(1, H), ln_g.reshape(1, H), ln_b.reshape(1, H))


def _head_kernel(cls_ref, wp_ref, bp_ref, wproj_ref, o_ref):
    # BERT pooler: tanh(cls @ Wp + bp); bias-free proj; F.normalize(p=2, dim=1)
    cls = cls_ref[...].astype(jnp.float32)
    pooled = jnp.tanh(jnp.dot(cls, wp_ref[...], preferred_element_type=jnp.float32)
                      + bp_ref[...])
    e = jnp.dot(pooled, wproj_ref[...], preferred_element_type=jnp.float32)
    norm = jnp.sqrt(jnp.sum(e * e, axis=-1, keepdims=True))
    o_ref[...] = (e / jnp.maximum(norm, 1e-12)).astype(o_ref.dtype)


def pooler_proj_normalize(cls, wp, bp, wproj):
    B, H = cls.shape
    E = wproj.shape[1]
    return pl.pallas_call(
        _head_kernel,
        out_shape=jax.ShapeDtypeStruct((B, E), jnp.float32),
        grid=(1,),
        in_specs=[
            pl.BlockSpec((B, H), lambda i: (0, 0)),
            pl.BlockSpec((H, H), lambda i: (0, 0)),
            pl.BlockSpec((1, H), lambda i: (0, 0)),
            pl.BlockSpec((H, E), lambda i: (0, 0)),
        ],
        out_specs=pl.BlockSpec((B, E), lambda i: (0, 0)),
    )(cls, wp, bp.reshape(1, H), wproj)


# -----------------------------------------------------------------------------
# Model (small synthetic BERT config + projection head)
# -----------------------------------------------------------------------------
CFG = dict(
    vocab_size=100,
    hidden_size=32,
    num_layers=2,
    num_heads=4,
    intermediate_size=64,
    max_position=16,
    type_vocab_size=2,
    embed_dim=16,
    layer_norm_eps=1e-12,
)


def init_params(key):
    keys = iter(jax.random.split(key, 64))
    H = CFG["hidden_size"]
    I = CFG["intermediate_size"]

    def w(shape):
        return 0.02 * jax.random.normal(next(keys), shape, jnp.float32)

    params = {
        "word_emb": w((CFG["vocab_size"], H)),
        "pos_emb": w((CFG["max_position"], H)),
        "type_emb": w((CFG["type_vocab_size"], H)),
        "emb_ln_g": jnp.ones((H,), jnp.float32),
        "emb_ln_b": jnp.zeros((H,), jnp.float32),
        "layers": [],
        "pooler_w": w((H, H)),
        "pooler_b": jnp.zeros((H,), jnp.float32),
        "proj_w": w((H, CFG["embed_dim"])),          # nn.Linear(hidden, embed_dim, bias=False)
    }
    for _ in range(CFG["num_layers"]):
        wq, wk, wv = w((H, H)), w((H, H)), w((H, H))
        bq = bk = bv = jnp.zeros((H,), jnp.float32)
        params["layers"].append({
            # fused QKV projection: one (H, 3H) bf16 matmul instead of three (H, H)
            "w_qkv": jnp.concatenate([wq, wk, wv], axis=1).astype(COMPUTE_DTYPE),
            "b_qkv": jnp.concatenate([bq, bk, bv], axis=0),
            "wo": w((H, H)).astype(COMPUTE_DTYPE), "bo": jnp.zeros((H,), jnp.float32),
            "ln1_g": jnp.ones((H,), jnp.float32), "ln1_b": jnp.zeros((H,), jnp.float32),
            "w1": w((H, I)).astype(COMPUTE_DTYPE), "b1": jnp.zeros((I,), jnp.float32),
            "w2": w((I, H)).astype(COMPUTE_DTYPE), "b2": jnp.zeros((H,), jnp.float32),
            "ln2_g": jnp.ones((H,), jnp.float32), "ln2_b": jnp.zeros((H,), jnp.float32),
        })
    return params


def pretrained_bert_forward(params, caption_ids, attn_mask):
    B, S = caption_ids.shape
    H = CFG["hidden_size"]
    nH = CFG["num_heads"]
    eps = CFG["layer_norm_eps"]

    # ---- embeddings: gather (no one-hot matmul) + tiny broadcast adds, then LN kernel ----
    word = jnp.take(params["word_emb"], caption_ids, axis=0)                       # (B, S, H)
    emb = (word
           + params["pos_emb"][:S][None, :, :]
           + params["type_emb"][0][None, None, :])                                 # token_type_ids = 0
    h = layernorm(emb.reshape(B * S, H), params["emb_ln_g"], params["emb_ln_b"],
                  eps, out_dtype=COMPUTE_DTYPE)                                     # (B*S, H) bf16

    # additive attention mask kept in f32 (added to f32 scores inside the kernel)
    add_mask = ((1.0 - attn_mask.astype(jnp.float32)) * -1e9).reshape(B, 1, S)

    # ---- transformer encoder layers ----
    for lyr in params["layers"]:
        qkv = dense(h, lyr["w_qkv"], lyr["b_qkv"])                                  # (B*S, 3H)
        h = attention_block(qkv.reshape(B, S, 3 * H), add_mask, h.reshape(B, S, H),
                            lyr["wo"], lyr["bo"], lyr["ln1_g"], lyr["ln1_b"],
                            num_heads=nH, eps=eps).reshape(B * S, H)
        h = ffn_block(h, lyr["w1"], lyr["b1"], lyr["w2"], lyr["b2"],
                      lyr["ln2_g"], lyr["ln2_b"], eps)

    # ---- pooler ([CLS]) + projection + L2 normalize, fused in one kernel ----
    cls = h.reshape(B, S, H)[:, 0, :]                                               # (B, H)
    return pooler_proj_normalize(cls, params["pooler_w"], params["pooler_b"], params["proj_w"])


# -----------------------------------------------------------------------------
if __name__ == "__main__":
    key = jax.random.PRNGKey(0)
    pkey, ikey = jax.random.split(key)

    params = init_params(pkey)

    B, S = 2, 8
    caption_ids = jax.random.randint(ikey, (B, S), 0, CFG["vocab_size"], dtype=jnp.int32)
    # first 6 tokens valid, last 2 padded
    attn_mask = jnp.concatenate(
        [jnp.ones((B, 6), jnp.int32), jnp.zeros((B, S - 6), jnp.int32)], axis=1)

    fwd = jax.jit(pretrained_bert_forward)
    out = fwd(params, caption_ids, attn_mask)
    out = jax.block_until_ready(out)

    assert out.shape == (B, CFG["embed_dim"])
    assert bool(jnp.all(jnp.isfinite(out)))
    # rows should be unit-norm after F.normalize
    assert bool(jnp.allclose(jnp.linalg.norm(out, axis=1), 1.0, atol=1e-5))
    print("KERNEL_OK")
</pallas_src>

<mosaic_0001>
module attributes {stable_mosaic.version = 11 : i64} {
  func.func @_layernorm_kernel(%arg0: i32, %arg1: memref<16x32xf32, #tpu.memory_space<vmem>>, %arg2: memref<1x32xf32, #tpu.memory_space<vmem>>, %arg3: memref<1x32xf32, #tpu.memory_space<vmem>>, %arg4: memref<16x32xbf16, #tpu.memory_space<vmem>>) attributes {dimension_semantics = [#tpu.dimension_semantics<parallel>], iteration_bounds = array<i64: 1>, scalar_prefetch = 0 : i64, scratch_operands = 0 : i64, tpu.core_type = #tpu.core_type<tc>, window_params = [{transform_indices = @transform_0, window_bounds = array<i64: 16, 32>}, {pipeline_mode = #tpu.pipeline_mode<synchronous>, transform_indices = @transform_1, window_bounds = array<i64: 1, 32>}, {pipeline_mode = #tpu.pipeline_mode<synchronous>, transform_indices = @transform_2, window_bounds = array<i64: 1, 32>}, {transform_indices = @transform_3, window_bounds = array<i64: 16, 32>}]} {
    %c0 = arith.constant 0 : index
    %c0_0 = arith.constant 0 : index
    %0 = vector.load %arg1[%c0, %c0_0] : memref<16x32xf32, #tpu.memory_space<vmem>>, vector<16x32xf32>
    %c0_1 = arith.constant 0 : index
    %c0_2 = arith.constant 0 : index
    %1 = vector.load %arg2[%c0_1, %c0_2] : memref<1x32xf32, #tpu.memory_space<vmem>>, vector<1x32xf32>
    %c0_3 = arith.constant 0 : index
    %c0_4 = arith.constant 0 : index
    %2 = vector.load %arg3[%c0_3, %c0_4] : memref<1x32xf32, #tpu.memory_space<vmem>>, vector<1x32xf32>
    %cst = arith.constant dense<0.000000e+00> : vector<16xf32>
    %3 = vector.multi_reduction <add>, %0, %cst [1] : vector<16x32xf32> to vector<16xf32>
    %4 = vector.shape_cast %3 : vector<16xf32> to vector<16x1xf32>
    %cst_5 = arith.constant 3.200000e+01 : f32
    %5 = vector.broadcast %cst_5 : f32 to vector<16x1xf32>
    %6 = arith.divf %4, %5 : vector<16x1xf32>
    %7 = vector.broadcast %6 : vector<16x1xf32> to vector<16x32xf32>
    %8 = arith.subf %0, %7 : vector<16x32xf32>
    %9 = arith.mulf %8, %8 : vector<16x32xf32>
    %cst_6 = arith.constant dense<0.000000e+00> : vector<16xf32>
    %10 = vector.multi_reduction <add>, %9, %cst_6 [1] : vector<16x32xf32> to vector<16xf32>
    %11 = vector.shape_cast %10 : vector<16xf32> to vector<16x1xf32>
    %cst_7 = arith.constant 3.200000e+01 : f32
    %12 = vector.broadcast %cst_7 : f32 to vector<16x1xf32>
    %13 = arith.divf %11, %12 : vector<16x1xf32>
    %14 = vector.broadcast %6 : vector<16x1xf32> to vector<16x32xf32>
    %15 = arith.subf %0, %14 : vector<16x32xf32>
    %cst_8 = arith.constant 9.99999996E-13 : f32
    %16 = vector.broadcast %cst_8 : f32 to vector<16x1xf32>
    %17 = arith.addf %13, %16 : vector<16x1xf32>
    %18 = math.rsqrt %17 : vector<16x1xf32>
    %19 = vector.broadcast %18 : vector<16x1xf32> to vector<16x32xf32>
    %20 = arith.mulf %15, %19 : vector<16x32xf32>
    %21 = vector.broadcast %1 : vector<1x32xf32> to vector<16x32xf32>
    %22 = arith.mulf %20, %21 : vector<16x32xf32>
    %23 = vector.broadcast %2 : vector<1x32xf32> to vector<16x32xf32>
    %24 = arith.addf %22, %23 : vector<16x32xf32>
    %25 = arith.truncf %24 : vector<16x32xf32> to vector<16x32xbf16>
    %c0_9 = arith.constant 0 : index
    %c0_10 = arith.constant 0 : index
    %26 = vector.load %arg4[%c0_9, %c0_10] : memref<16x32xbf16, #tpu.memory_space<vmem>>, vector<16x32xbf16>
    tpu.vector_store %arg4[%c0_9, %c0_10], %25 {strides = array<i32>} : memref<16x32xbf16, #tpu.memory_space<vmem>>, vector<16x32xbf16>,
    return
  }
  func.func @transform_0(%arg0: i32) -> (i32, i32) {
    %c0_i32 = arith.constant 0 : i32
    %c0_i32_0 = arith.constant 0 : i32
    return %arg0, %c0_i32 : i32, i32
  }
  func.func @transform_1(%arg0: i32) -> (i32, i32) {
    %c0_i32 = arith.constant 0 : i32
    %c0_i32_0 = arith.constant 0 : i32
    %c0_i32_1 = arith.constant 0 : i32
    return %c0_i32, %c0_i32_0 : i32, i32
  }
  func.func @transform_2(%arg0: i32) -> (i32, i32) {
    %c0_i32 = arith.constant 0 : i32
    %c0_i32_0 = arith.constant 0 : i32
    %c0_i32_1 = arith.constant 0 : i32
    return %c0_i32, %c0_i32_0 : i32, i32
  }
  func.func @transform_3(%arg0: i32) -> (i32, i32) {
    %c0_i32 = arith.constant 0 : i32
    %c0_i32_0 = arith.constant 0 : i32
    return %arg0, %c0_i32 : i32, i32
  }
}

module attributes {stable_mosaic.version = 11 : i64} {
  func.func @_dense_kernel(%arg0: i32, %arg1: memref<16x32xbf16, #tpu.memory_space<vmem>>, %arg2: memref<32x96xbf16, #tpu.memory_space<vmem>>, %arg3: memref<1x96xf32, #tpu.memory_space<vmem>>, %arg4: memref<16x96xbf16, #tpu.memory_space<vmem>>) attributes {dimension_semantics = [#tpu.dimension_semantics<parallel>], iteration_bounds = array<i64: 1>, scalar_prefetch = 0 : i64, scratch_operands = 0 : i64, tpu.core_type = #tpu.core_type<tc>, window_params = [{transform_indices = @transform_0, window_bounds = array<i64: 16, 32>}, {pipeline_mode = #tpu.pipeline_mode<synchronous>, transform_indices = @transform_1, window_bounds = array<i64: 32, 96>}, {pipeline_mode = #tpu.pipeline_mode<synchronous>, transform_indices = @transform_2, window_bounds = array<i64: 1, 96>}, {transform_indices = @transform_3, window_bounds = array<i64: 16, 96>}]} {
    %c0 = arith.constant 0 : index
    %c0_0 = arith.constant 0 : index
    %0 = vector.load %arg1[%c0, %c0_0] : memref<16x32xbf16, #tpu.memory_space<vmem>>, vector<16x32xbf16>
    %c0_1 = arith.constant 0 : index
    %c0_2 = arith.constant 0 : index
    %1 = vector.load %arg2[%c0_1, %c0_2] : memref<32x96xbf16, #tpu.memory_space<vmem>>, vector<32x96xbf16>
    %cst = arith.constant dense<0.000000e+00> : vector<16x96xf32>
    %2 = tpu.matmul %0, %1, %cst {dimension_numbers = #tpu.dot_dimension_numbers<[1], [0], [0], [1], [0, 0, 1, 1], [], []>} : vector<16x32xbf16>, vector<32x96xbf16>, vector<16x96xf32> -> vector<16x96xf32>
    %c0_3 = arith.constant 0 : index
    %c0_4 = arith.constant 0 : index
    %3 = vector.load %arg3[%c0_3, %c0_4] : memref<1x96xf32, #tpu.memory_space<vmem>>, vector<1x96xf32>
    %4 = vector.broadcast %3 : vector<1x96xf32> to vector<16x96xf32>
    %5 = arith.addf %2, %4 : vector<16x96xf32>
    %6 = arith.truncf %5 : vector<16x96xf32> to vector<16x96xbf16>
    %c0_5 = arith.constant 0 : index
    %c0_6 = arith.constant 0 : index
    %7 = vector.load %arg4[%c0_5, %c0_6] : memref<16x96xbf16, #tpu.memory_space<vmem>>, vector<16x96xbf16>
    tpu.vector_store %arg4[%c0_5, %c0_6], %6 {strides = array<i32>} : memref<16x96xbf16, #tpu.memory_space<vmem>>, vector<16x96xbf16>,
    return
  }
  func.func @transform_0(%arg0: i32) -> (i32, i32) {
    %c0_i32 = arith.constant 0 : i32
    %c0_i32_0 = arith.constant 0 : i32
    return %arg0, %c0_i32 : i32, i32
  }
  func.func @transform_1(%arg0: i32) -> (i32, i32) {
    %c0_i32 = arith.constant 0 : i32
    %c0_i32_0 = arith.constant 0 : i32
    %c0_i32_1 = arith.constant 0 : i32
    return %c0_i32, %c0_i32_0 : i32, i32
  }
  func.func @transform_2(%arg0: i32) -> (i32, i32) {
    %c0_i32 = arith.constant 0 : i32
    %c0_i32_0 = arith.constant 0 : i32
    %c0_i32_1 = arith.constant 0 : i32
    return %c0_i32, %c0_i32_0 : i32, i32
  }
  func.func @transform_3(%arg0: i32) -> (i32, i32) {
    %c0_i32 = arith.constant 0 : i32
    %c0_i32_0 = arith.constant 0 : i32
    return %arg0, %c0_i32 : i32, i32
  }
}

module attributes {stable_mosaic.version = 11 : i64} {
  func.func @_attn_block_kernel(%arg0: i32, %arg1: memref<1x8x96xbf16, #tpu.memory_space<vmem>>, %arg2: memref<1x1x8xf32, #tpu.memory_space<vmem>>, %arg3: memref<1x8x32xbf16, #tpu.memory_space<vmem>>, %arg4: memref<32x32xbf16, #tpu.memory_space<vmem>>, %arg5: memref<1x32xf32, #tpu.memory_space<vmem>>, %arg6: memref<1x32xf32, #tpu.memory_space<vmem>>, %arg7: memref<1x32xf32, #tpu.memory_space<vmem>>, %arg8: memref<1x8x32xbf16, #tpu.memory_space<vmem>>) attributes {dimension_semantics = [#tpu.dimension_semantics<parallel>], iteration_bounds = array<i64: 2>, scalar_prefetch = 0 : i64, scratch_operands = 0 : i64, tpu.core_type = #tpu.core_type<tc>, window_params = [{transform_indices = @transform_0, window_bounds = array<i64: 1, 8, 96>}, {transform_indices = @transform_1, window_bounds = array<i64: 1, 1, 8>}, {transform_indices = @transform_2, window_bounds = array<i64: 1, 8, 32>}, {pipeline_mode = #tpu.pipeline_mode<synchronous>, transform_indices = @transform_3, window_bounds = array<i64: 32, 32>}, {pipeline_mode = #tpu.pipeline_mode<synchronous>, transform_indices = @transform_4, window_bounds = array<i64: 1, 32>}, {pipeline_mode = #tpu.pipeline_mode<synchronous>, transform_indices = @transform_5, window_bounds = array<i64: 1, 32>}, {pipeline_mode = #tpu.pipeline_mode<synchronous>, transform_indices = @transform_6, window_bounds = array<i64: 1, 32>}, {transform_indices = @transform_7, window_bounds = array<i64: 1, 8, 32>}]} {
    %c0 = arith.constant 0 : index
    %c0_0 = arith.constant 0 : index
    %c0_1 = arith.constant 0 : index
    %0 = vector.load %arg1[%c0, %c0_0, %c0_1] : memref<1x8x96xbf16, #tpu.memory_space<vmem>>, vector<1x8x96xbf16>
    %1 = vector.shape_cast %0 : vector<1x8x96xbf16> to vector<8x96xbf16>
    %2 = arith.extf %1 : vector<8x96xbf16> to vector<8x96xf32>
    %c0_2 = arith.constant 0 : index
    %c0_3 = arith.constant 0 : index
    %c0_4 = arith.constant 0 : index
    %3 = vector.load %arg2[%c0_2, %c0_3, %c0_4] : memref<1x1x8xf32, #tpu.memory_space<vmem>>, vector<1x1x8xf32>
    %4 = vector.shape_cast %3 : vector<1x1x8xf32> to vector<1x8xf32>
    %5 = vector.extract_strided_slice %2 {offsets = [0, 0], sizes = [8, 8], strides = [1, 1]} : vector<8x96xf32> to vector<8x8xf32>
    %6 = vector.extract_strided_slice %2 {offsets = [0, 32], sizes = [8, 8], strides = [1, 1]} : vector<8x96xf32> to vector<8x8xf32>
    %7 = vector.extract_strided_slice %2 {offsets = [0, 64], sizes = [8, 8], strides = [1, 1]} : vector<8x96xf32> to vector<8x8xf32>
    %cst = arith.constant dense<0.000000e+00> : vector<8x8xf32>
    %8 = tpu.matmul %5, %6, %cst {dimension_numbers = #tpu.dot_dimension_numbers<[1], [1], [0], [0], [0, 0, 1, 0], [], []>} : vector<8x8xf32>, vector<8x8xf32>, vector<8x8xf32> -> vector<8x8xf32>
    %cst_5 = arith.constant 0.353553385 : f32
    %9 = vector.broadcast %cst_5 : f32 to vector<8x8xf32>
    %10 = arith.mulf %8, %9 : vector<8x8xf32>
    %11 = vector.broadcast %4 : vector<1x8xf32> to vector<8x8xf32>
    %12 = arith.addf %10, %11 : vector<8x8xf32>
    %cst_6 = arith.constant dense<0xFF800000> : vector<8xf32>
    %13 = vector.multi_reduction <maximumf>, %12, %cst_6 [1] : vector<8x8xf32> to vector<8xf32>
    %14 = vector.shape_cast %13 : vector<8xf32> to vector<8x1xf32>
    %15 = vector.broadcast %14 : vector<8x1xf32> to vector<8x8xf32>
    %16 = arith.subf %12, %15 : vector<8x8xf32>
    %17 = math.exp %16 : vector<8x8xf32>
    %cst_7 = arith.constant dense<0.000000e+00> : vector<8xf32>
    %18 = vector.multi_reduction <add>, %17, %cst_7 [1] : vector<8x8xf32> to vector<8xf32>
    %19 = vector.shape_cast %18 : vector<8xf32> to vector<8x1xf32>
    %20 = tpu.reciprocal %19 {approx = true} : vector<8x1xf32> -> vector<8x1xf32>
    %21 = vector.broadcast %20 : vector<8x1xf32> to vector<8x8xf32>
    %22 = arith.mulf %17, %21 : vector<8x8xf32>
    %cst_8 = arith.constant dense<0.000000e+00> : vector<8x8xf32>
    %23 = tpu.matmul %22, %7, %cst_8 {dimension_numbers = #tpu.dot_dimension_numbers<[1], [0], [0], [1], [0, 0, 1, 1], [], []>} : vector<8x8xf32>, vector<8x8xf32>, vector<8x8xf32> -> vector<8x8xf32>
    %24 = vector.extract_strided_slice %2 {offsets = [0, 8], sizes = [8, 8], strides = [1, 1]} : vector<8x96xf32> to vector<8x8xf32>
    %25 = vector.extract_strided_slice %2 {offsets = [0, 40], sizes = [8, 8], strides = [1, 1]} : vector<8x96xf32> to vector<8x8xf32>
    %26 = vector.extract_strided_slice %2 {offsets = [0, 72], sizes = [8, 8], strides = [1, 1]} : vector<8x96xf32> to vector<8x8xf32>
    %cst_9 = arith.constant dense<0.000000e+00> : vector<8x8xf32>
    %27 = tpu.matmul %24, %25, %cst_9 {dimension_numbers = #tpu.dot_dimension_numbers<[1], [1], [0], [0], [0, 0, 1, 0], [], []>} : vector<8x8xf32>, vector<8x8xf32>, vector<8x8xf32> -> vector<8x8xf32>
    %cst_10 = arith.constant 0.353553385 : f32
    %28 = vector.broadcast %cst_10 : f32 to vector<8x8xf32>
    %29 = arith.mulf %27, %28 : vector<8x8xf32>
    %30 = vector.broadcast %4 : vector<1x8xf32> to vector<8x8xf32>
    %31 = arith.addf %29, %30 : vector<8x8xf32>
    %cst_11 = arith.constant dense<0xFF800000> : vector<8xf32>
    %32 = vector.multi_reduction <maximumf>, %31, %cst_11 [1] : vector<8x8xf32> to vector<8xf32>
    %33 = vector.shape_cast %32 : vector<8xf32> to vector<8x1xf32>
    %34 = vector.broadcast %33 : vector<8x1xf32> to vector<8x8xf32>
    %35 = arith.subf %31, %34 : vector<8x8xf32>
    %36 = math.exp %35 : vector<8x8xf32>
    %cst_12 = arith.constant dense<0.000000e+00> : vector<8xf32>
    %37 = vector.multi_reduction <add>, %36, %cst_12 [1] : vector<8x8xf32> to vector<8xf32>
    %38 = vector.shape_cast %37 : vector<8xf32> to vector<8x1xf32>
    %39 = tpu.reciprocal %38 {approx = true} : vector<8x1xf32> -> vector<8x1xf32>
    %40 = vector.broadcast %39 : vector<8x1xf32> to vector<8x8xf32>
    %41 = arith.mulf %36, %40 : vector<8x8xf32>
    %cst_13 = arith.constant dense<0.000000e+00> : vector<8x8xf32>
    %42 = tpu.matmul %41, %26, %cst_13 {dimension_numbers = #tpu.dot_dimension_numbers<[1], [0], [0], [1], [0, 0, 1, 1], [], []>} : vector<8x8xf32>, vector<8x8xf32>, vector<8x8xf32> -> vector<8x8xf32>
    %43 = vector.extract_strided_slice %2 {offsets = [0, 16], sizes = [8, 8], strides = [1, 1]} : vector<8x96xf32> to vector<8x8xf32>
    %44 = vector.extract_strided_slice %2 {offsets = [0, 48], sizes = [8, 8], strides = [1, 1]} : vector<8x96xf32> to vector<8x8xf32>
    %45 = vector.extract_strided_slice %2 {offsets = [0, 80], sizes = [8, 8], strides = [1, 1]} : vector<8x96xf32> to vector<8x8xf32>
    %cst_14 = arith.constant dense<0.000000e+00> : vector<8x8xf32>
    %46 = tpu.matmul %43, %44, %cst_14 {dimension_numbers = #tpu.dot_dimension_numbers<[1], [1], [0], [0], [0, 0, 1, 0], [], []>} : vector<8x8xf32>, vector<8x8xf32>, vector<8x8xf32> -> vector<8x8xf32>
    %cst_15 = arith.constant 0.353553385 : f32
    %47 = vector.broadcast %cst_15 : f32 to vector<8x8xf32>
    %48 = arith.mulf %46, %47 : vector<8x8xf32>
    %49 = vector.broadcast %4 : vector<1x8xf32> to vector<8x8xf32>
    %50 = arith.addf %48, %49 : vector<8x8xf32>
    %cst_16 = arith.constant dense<0xFF800000> : vector<8xf32>
    %51 = vector.multi_reduction <maximumf>, %50, %cst_16 [1] : vector<8x8xf32> to vector<8xf32>
    %52 = vector.shape_cast %51 : vector<8xf32> to vector<8x1xf32>
    %53 = vector.broadcast %52 : vector<8x1xf32> to vector<8x8xf32>
    %54 = arith.subf %50, %53 : vector<8x8xf32>
    %55 = math.exp %54 : vector<8x8xf32>
    %cst_17 = arith.constant dense<0.000000e+00> : vector<8xf32>
    %56 = vector.multi_reduction <add>, %55, %cst_17 [1] : vector<8x8xf32> to vector<8xf32>
    %57 = vector.shape_cast %56 : vector<8xf32> to vector<8x1xf32>
    %58 = tpu.reciprocal %57 {approx = true} : vector<8x1xf32> -> vector<8x1xf32>
    %59 = vector.broadcast %58 : vector<8x1xf32> to vector<8x8xf32>
    %60 = arith.mulf %55, %59 : vector<8x8xf32>
    %cst_18 = arith.constant dense<0.000000e+00> : vector<8x8xf32>
    %61 = tpu.matmul %60, %45, %cst_18 {dimension_numbers = #tpu.dot_dimension_numbers<[1], [0], [0], [1], [0, 0, 1, 1], [], []>} : vector<8x8xf32>, vector<8x8xf32>, vector<8x8xf32> -> vector<8x8xf32>
    %62 = vector.extract_strided_slice %2 {offsets = [0, 24], sizes = [8, 8], strides = [1, 1]} : vector<8x96xf32> to vector<8x8xf32>
    %63 = vector.extract_strided_slice %2 {offsets = [0, 56], sizes = [8, 8], strides = [1, 1]} : vector<8x96xf32> to vector<8x8xf32>
    %64 = vector.extract_strided_slice %2 {offsets = [0, 88], sizes = [8, 8], strides = [1, 1]} : vector<8x96xf32> to vector<8x8xf32>
    %cst_19 = arith.constant dense<0.000000e+00> : vector<8x8xf32>
    %65 = tpu.matmul %62, %63, %cst_19 {dimension_numbers = #tpu.dot_dimension_numbers<[1], [1], [0], [0], [0, 0, 1, 0], [], []>} : vector<8x8xf32>, vector<8x8xf32>, vector<8x8xf32> -> vector<8x8xf32>
    %cst_20 = arith.constant 0.353553385 : f32
    %66 = vector.broadcast %cst_20 : f32 to vector<8x8xf32>
    %67 = arith.mulf %65, %66 : vector<8x8xf32>
    %68 = vector.broadcast %4 : vector<1x8xf32> to vector<8x8xf32>
    %69 = arith.addf %67, %68 : vector<8x8xf32>
    %cst_21 = arith.constant dense<0xFF800000> : vector<8xf32>
    %70 = vector.multi_reduction <maximumf>, %69, %cst_21 [1] : vector<8x8xf32> to vector<8xf32>
    %71 = vector.shape_cast %70 : vector<8xf32> to vector<8x1xf32>
    %72 = vector.broadcast %71 : vector<8x1xf32> to vector<8x8xf32>
    %73 = arith.subf %69, %72 : vector<8x8xf32>
    %74 = math.exp %73 : vector<8x8xf32>
    %cst_22 = arith.constant dense<0.000000e+00> : vector<8xf32>
    %75 = vector.multi_reduction <add>, %74, %cst_22 [1] : vector<8x8xf32> to vector<8xf32>
    %76 = vector.shape_cast %75 : vector<8xf32> to vector<8x1xf32>
    %77 = tpu.reciprocal %76 {approx = true} : vector<8x1xf32> -> vector<8x1xf32>
    %78 = vector.broadcast %77 : vector<8x1xf32> to vector<8x8xf32>
    %79 = arith.mulf %74, %78 : vector<8x8xf32>
    %cst_23 = arith.constant dense<0.000000e+00> : vector<8x8xf32>
    %80 = tpu.matmul %79, %64, %cst_23 {dimension_numbers = #tpu.dot_dimension_numbers<[1], [0], [0], [1], [0, 0, 1, 1], [], []>} : vector<8x8xf32>, vector<8x8xf32>, vector<8x8xf32> -> vector<8x8xf32>
    %81 = tpu.concatenate %23, %42, %61, %80 in 1 : vector<8x8xf32>, vector<8x8xf32>, vector<8x8xf32>, vector<8x8xf32> -> vector<8x32xf32>
    %82 = arith.truncf %81 : vector<8x32xf32> to vector<8x32xbf16>
    %c0_24 = arith.constant 0 : index
    %c0_25 = arith.constant 0 : index
    %83 = vector.load %arg4[%c0_24, %c0_25] : memref<32x32xbf16, #tpu.memory_space<vmem>>, vector<32x32xbf16>
    %cst_26 = arith.constant dense<0.000000e+00> : vector<8x32xf32>
    %84 = tpu.matmul %82, %83, %cst_26 {dimension_numbers = #tpu.dot_dimension_numbers<[1], [0], [0], [1], [0, 0, 1, 1], [], []>} : vector<8x32xbf16>, vector<32x32xbf16>, vector<8x32xf32> -> vector<8x32xf32>
    %c0_27 = arith.constant 0 : index
    %c0_28 = arith.constant 0 : index
    %85 = vector.load %arg5[%c0_27, %c0_28] : memref<1x32xf32, #tpu.memory_space<vmem>>, vector<1x32xf32>
    %86 = vector.broadcast %85 : vector<1x32xf32> to vector<8x32xf32>
    %87 = arith.addf %84, %86 : vector<8x32xf32>
    %c0_29 = arith.constant 0 : index
    %c0_30 = arith.constant 0 : index
    %c0_31 = arith.constant 0 : index
    %88 = vector.load %arg3[%c0_29, %c0_30, %c0_31] : memref<1x8x32xbf16, #tpu.memory_space<vmem>>, vector<1x8x32xbf16>
    %89 = vector.shape_cast %88 : vector<1x8x32xbf16> to vector<8x32xbf16>
    %90 = arith.extf %89 : vector<8x32xbf16> to vector<8x32xf32>
    %91 = arith.addf %90, %87 : vector<8x32xf32>
    %c0_32 = arith.constant 0 : index
    %c0_33 = arith.constant 0 : index
    %92 = vector.load %arg6[%c0_32, %c0_33] : memref<1x32xf32, #tpu.memory_space<vmem>>, vector<1x32xf32>
    %c0_34 = arith.constant 0 : index
    %c0_35 = arith.constant 0 : index
    %93 = vector.load %arg7[%c0_34, %c0_35] : memref<1x32xf32, #tpu.memory_space<vmem>>, vector<1x32xf32>
    %cst_36 = arith.constant dense<0.000000e+00> : vector<8xf32>
    %94 = vector.multi_reduction <add>, %91, %cst_36 [1] : vector<8x32xf32> to vector<8xf32>
    %95 = vector.shape_cast %94 : vector<8xf32> to vector<8x1xf32>
    %cst_37 = arith.constant 3.200000e+01 : f32
    %96 = vector.broadcast %cst_37 : f32 to vector<8x1xf32>
    %97 = arith.divf %95, %96 : vector<8x1xf32>
    %98 = vector.broadcast %97 : vector<8x1xf32> to vector<8x32xf32>
    %99 = arith.subf %91, %98 : vector<8x32xf32>
    %100 = arith.mulf %99, %99 : vector<8x32xf32>
    %cst_38 = arith.constant dense<0.000000e+00> : vector<8xf32>
    %101 = vector.multi_reduction <add>, %100, %cst_38 [1] : vector<8x32xf32> to vector<8xf32>
    %102 = vector.shape_cast %101 : vector<8xf32> to vector<8x1xf32>
    %cst_39 = arith.constant 3.200000e+01 : f32
    %103 = vector.broadcast %cst_39 : f32 to vector<8x1xf32>
    %104 = arith.divf %102, %103 : vector<8x1xf32>
    %105 = vector.broadcast %97 : vector<8x1xf32> to vector<8x32xf32>
    %106 = arith.subf %91, %105 : vector<8x32xf32>
    %cst_40 = arith.constant 9.99999996E-13 : f32
    %107 = vector.broadcast %cst_40 : f32 to vector<8x1xf32>
    %108 = arith.addf %104, %107 : vector<8x1xf32>
    %109 = math.rsqrt %108 : vector<8x1xf32>
    %110 = vector.broadcast %109 : vector<8x1xf32> to vector<8x32xf32>
    %111 = arith.mulf %106, %110 : vector<8x32xf32>
    %112 = vector.broadcast %92 : vector<1x32xf32> to vector<8x32xf32>
    %113 = arith.mulf %111, %112 : vector<8x32xf32>
    %114 = vector.broadcast %93 : vector<1x32xf32> to vector<8x32xf32>
    %115 = arith.addf %113, %114 : vector<8x32xf32>
    %116 = arith.truncf %115 : vector<8x32xf32> to vector<8x32xbf16>
    %c0_41 = arith.constant 0 : index
    %c0_42 = arith.constant 0 : index
    %c0_43 = arith.constant 0 : index
    %117 = vector.load %arg8[%c0_41, %c0_42, %c0_43] : memref<1x8x32xbf16, #tpu.memory_space<vmem>>, vector<1x8x32xbf16>
    %118 = vector.shape_cast %117 : vector<1x8x32xbf16> to vector<8x32xbf16>
    %119 = vector.shape_cast %116 : vector<8x32xbf16> to vector<1x8x32xbf16>
    tpu.vector_store %arg8[%c0_41, %c0_42, %c0_43], %119 {strides = array<i32>} : memref<1x8x32xbf16, #tpu.memory_space<vmem>>, vector<1x8x32xbf16>,
    return
  }
  func.func @transform_0(%arg0: i32) -> (i32, i32, i32) {
    %c0_i32 = arith.constant 0 : i32
    %c0_i32_0 = arith.constant 0 : i32
    %c0_i32_1 = arith.constant 0 : i32
    return %arg0, %c0_i32, %c0_i32_0 : i32, i32, i32
  }
  func.func @transform_1(%arg0: i32) -> (i32, i32, i32) {
    %c0_i32 = arith.constant 0 : i32
    %c0_i32_0 = arith.constant 0 : i32
    %c0_i32_1 = arith.constant 0 : i32
    return %arg0, %c0_i32, %c0_i32_0 : i32, i32, i32
  }
  func.func @transform_2(%arg0: i32) -> (i32, i32, i32) {
    %c0_i32 = arith.constant 0 : i32
    %c0_i32_0 = arith.constant 0 : i32
    %c0_i32_1 = arith.constant 0 : i32
    return %arg0, %c0_i32, %c0_i32_0 : i32, i32, i32
  }
  func.func @transform_3(%arg0: i32) -> (i32, i32) {
    %c0_i32 = arith.constant 0 : i32
    %c0_i32_0 = arith.constant 0 : i32
    %c0_i32_1 = arith.constant 0 : i32
    return %c0_i32, %c0_i32_0 : i32, i32
  }
  func.func @transform_4(%arg0: i32) -> (i32, i32) {
    %c0_i32 = arith.constant 0 : i32
    %c0_i32_0 = arith.constant 0 : i32
    %c0_i32_1 = arith.constant 0 : i32
    return %c0_i32, %c0_i32_0 : i32, i32
  }
  func.func @transform_5(%arg0: i32) -> (i32, i32) {
    %c0_i32 = arith.constant 0 : i32
    %c0_i32_0 = arith.constant 0 : i32
    %c0_i32_1 = arith.constant 0 : i32
    return %c0_i32, %c0_i32_0 : i32, i32
  }
  func.func @transform_6(%arg0: i32) -> (i32, i32) {
    %c0_i32 = arith.constant 0 : i32
    %c0_i32_0 = arith.constant 0 : i32
    %c0_i32_1 = arith.constant 0 : i32
    return %c0_i32, %c0_i32_0 : i32, i32
  }
  func.func @transform_7(%arg0: i32) -> (i32, i32, i32) {
    %c0_i32 = arith.constant 0 : i32
    %c0_i32_0 = arith.constant 0 : i32
    %c0_i32_1 = arith.constant 0 : i32
    return %arg0, %c0_i32, %c0_i32_0 : i32, i32, i32
  }
}

module attributes {stable_mosaic.version = 11 : i64} {
  func.func @_ffn_block_kernel(%arg0: i32, %arg1: memref<16x32xbf16, #tpu.memory_space<vmem>>, %arg2: memref<32x64xbf16, #tpu.memory_space<vmem>>, %arg3: memref<1x64xf32, #tpu.memory_space<vmem>>, %arg4: memref<64x32xbf16, #tpu.memory_space<vmem>>, %arg5: memref<1x32xf32, #tpu.memory_space<vmem>>, %arg6: memref<1x32xf32, #tpu.memory_space<vmem>>, %arg7: memref<1x32xf32, #tpu.memory_space<vmem>>, %arg8: memref<16x32xbf16, #tpu.memory_space<vmem>>) attributes {dimension_semantics = [#tpu.dimension_semantics<parallel>], iteration_bounds = array<i64: 1>, scalar_prefetch = 0 : i64, scratch_operands = 0 : i64, tpu.core_type = #tpu.core_type<tc>, window_params = [{transform_indices = @transform_0, window_bounds = array<i64: 16, 32>}, {pipeline_mode = #tpu.pipeline_mode<synchronous>, transform_indices = @transform_1, window_bounds = array<i64: 32, 64>}, {pipeline_mode = #tpu.pipeline_mode<synchronous>, transform_indices = @transform_2, window_bounds = array<i64: 1, 64>}, {pipeline_mode = #tpu.pipeline_mode<synchronous>, transform_indices = @transform_3, window_bounds = array<i64: 64, 32>}, {pipeline_mode = #tpu.pipeline_mode<synchronous>, transform_indices = @transform_4, window_bounds = array<i64: 1, 32>}, {pipeline_mode = #tpu.pipeline_mode<synchronous>, transform_indices = @transform_5, window_bounds = array<i64: 1, 32>}, {pipeline_mode = #tpu.pipeline_mode<synchronous>, transform_indices = @transform_6, window_bounds = array<i64: 1, 32>}, {transform_indices = @transform_7, window_bounds = array<i64: 16, 32>}]} {
    %c0 = arith.constant 0 : index
    %c0_0 = arith.constant 0 : index
    %0 = vector.load %arg1[%c0, %c0_0] : memref<16x32xbf16, #tpu.memory_space<vmem>>, vector<16x32xbf16>
    %c0_1 = arith.constant 0 : index
    %c0_2 = arith.constant 0 : index
    %1 = vector.load %arg2[%c0_1, %c0_2] : memref<32x64xbf16, #tpu.memory_space<vmem>>, vector<32x64xbf16>
    %cst = arith.constant dense<0.000000e+00> : vector<16x64xf32>
    %2 = tpu.matmul %0, %1, %cst {dimension_numbers = #tpu.dot_dimension_numbers<[1], [0], [0], [1], [0, 0, 1, 1], [], []>} : vector<16x32xbf16>, vector<32x64xbf16>, vector<16x64xf32> -> vector<16x64xf32>
    %c0_3 = arith.constant 0 : index
    %c0_4 = arith.constant 0 : index
    %3 = vector.load %arg3[%c0_3, %c0_4] : memref<1x64xf32, #tpu.memory_space<vmem>>, vector<1x64xf32>
    %4 = vector.broadcast %3 : vector<1x64xf32> to vector<16x64xf32>
    %5 = arith.addf %2, %4 : vector<16x64xf32>
    %cst_5 = arith.constant 5.000000e-01 : f32
    %6 = vector.broadcast %cst_5 : f32 to vector<16x64xf32>
    %7 = arith.mulf %6, %5 : vector<16x64xf32>
    %cst_6 = arith.constant 0.707106769 : f32
    %8 = vector.broadcast %cst_6 : f32 to vector<16x64xf32>
    %9 = arith.mulf %5, %8 : vector<16x64xf32>
    %10 = math.absf %9 : vector<16x64xf32>
    %cst_7 = arith.constant 0.327591091 : f32
    %11 = vector.broadcast %cst_7 : f32 to vector<16x64xf32>
    %12 = arith.mulf %11, %10 : vector<16x64xf32>
    %cst_8 = arith.constant 1.000000e+00 : f32
    %13 = vector.broadcast %cst_8 : f32 to vector<16x64xf32>
    %14 = arith.addf %13, %12 : vector<16x64xf32>
    %cst_9 = arith.constant 1.000000e+00 : f32
    %15 = vector.broadcast %cst_9 : f32 to vector<16x64xf32>
    %16 = arith.divf %15, %14 : vector<16x64xf32>
    %cst_10 = arith.constant 1.06140542 : f32
    %17 = vector.broadcast %cst_10 : f32 to vector<16x64xf32>
    %18 = arith.mulf %16, %17 : vector<16x64xf32>
    %cst_11 = arith.constant -1.45315206 : f32
    %19 = vector.broadcast %cst_11 : f32 to vector<16x64xf32>
    %20 = arith.addf %19, %18 : vector<16x64xf32>
    %21 = arith.mulf %16, %20 : vector<16x64xf32>
    %cst_12 = arith.constant 1.42141378 : f32
    %22 = vector.broadcast %cst_12 : f32 to vector<16x64xf32>
    %23 = arith.addf %22, %21 : vector<16x64xf32>
    %24 = arith.mulf %16, %23 : vector<16x64xf32>
    %cst_13 = arith.constant -0.284496725 : f32
    %25 = vector.broadcast %cst_13 : f32 to vector<16x64xf32>
    %26 = arith.addf %25, %24 : vector<16x64xf32>
    %27 = arith.mulf %16, %26 : vector<16x64xf32>
    %cst_14 = arith.constant 0.254829586 : f32
    %28 = vector.broadcast %cst_14 : f32 to vector<16x64xf32>
    %29 = arith.addf %28, %27 : vector<16x64xf32>
    %30 = arith.mulf %16, %29 : vector<16x64xf32>
    %cst_15 = arith.constant 0.000000e+00 : f32
    %31 = vector.broadcast %cst_15 : f32 to vector<16x64xf32>
    %32 = arith.subf %31, %10 : vector<16x64xf32>
    %33 = arith.mulf %32, %10 : vector<16x64xf32>
    %34 = math.exp %33 : vector<16x64xf32>
    %35 = arith.mulf %30, %34 : vector<16x64xf32>
    %cst_16 = arith.constant 1.000000e+00 : f32
    %36 = vector.broadcast %cst_16 : f32 to vector<16x64xf32>
    %37 = arith.subf %36, %35 : vector<16x64xf32>
    %cst_17 = arith.constant 0.000000e+00 : f32
    %38 = vector.broadcast %cst_17 : f32 to vector<16x64xf32>
    %39 = arith.cmpf oge, %9, %38 : vector<16x64xf32>
    %cst_18 = arith.constant 0.000000e+00 : f32
    %40 = vector.broadcast %cst_18 : f32 to vector<16x64xf32>
    %41 = arith.subf %40, %37 : vector<16x64xf32>
    %42 = arith.select %39, %37, %41 : vector<16x64xi1>, vector<16x64xf32>
    %cst_19 = arith.constant 1.000000e+00 : f32
    %43 = vector.broadcast %cst_19 : f32 to vector<16x64xf32>
    %44 = arith.addf %43, %42 : vector<16x64xf32>
    %45 = arith.mulf %7, %44 : vector<16x64xf32>
    %46 = arith.truncf %45 : vector<16x64xf32> to vector<16x64xbf16>
    %c0_20 = arith.constant 0 : index
    %c0_21 = arith.constant 0 : index
    %47 = vector.load %arg4[%c0_20, %c0_21] : memref<64x32xbf16, #tpu.memory_space<vmem>>, vector<64x32xbf16>
    %cst_22 = arith.constant dense<0.000000e+00> : vector<16x32xf32>
    %48 = tpu.matmul %46, %47, %cst_22 {dimension_numbers = #tpu.dot_dimension_numbers<[1], [0], [0], [1], [0, 0, 1, 1], [], []>} : vector<16x64xbf16>, vector<64x32xbf16>, vector<16x32xf32> -> vector<16x32xf32>
    %c0_23 = arith.constant 0 : index
    %c0_24 = arith.constant 0 : index
    %49 = vector.load %arg5[%c0_23, %c0_24] : memref<1x32xf32, #tpu.memory_space<vmem>>, vector<1x32xf32>
    %50 = vector.broadcast %49 : vector<1x32xf32> to vector<16x32xf32>
    %51 = arith.addf %48, %50 : vector<16x32xf32>
    %52 = arith.extf %0 : vector<16x32xbf16> to vector<16x32xf32>
    %53 = arith.addf %52, %51 : vector<16x32xf32>
    %c0_25 = arith.constant 0 : index
    %c0_26 = arith.constant 0 : index
    %54 = vector.load %arg6[%c0_25, %c0_26] : memref<1x32xf32, #tpu.memory_space<vmem>>, vector<1x32xf32>
    %c0_27 = arith.constant 0 : index
    %c0_28 = arith.constant 0 : index
    %55 = vector.load %arg7[%c0_27, %c0_28] : memref<1x32xf32, #tpu.memory_space<vmem>>, vector<1x32xf32>
    %cst_29 = arith.constant dense<0.000000e+00> : vector<16xf32>
    %56 = vector.multi_reduction <add>, %53, %cst_29 [1] : vector<16x32xf32> to vector<16xf32>
    %57 = vector.shape_cast %56 : vector<16xf32> to vector<16x1xf32>
    %cst_30 = arith.constant 3.200000e+01 : f32
    %58 = vector.broadcast %cst_30 : f32 to vector<16x1xf32>
    %59 = arith.divf %57, %58 : vector<16x1xf32>
    %60 = vector.broadcast %59 : vector<16x1xf32> to vector<16x32xf32>
    %61 = arith.subf %53, %60 : vector<16x32xf32>
    %62 = arith.mulf %61, %61 : vector<16x32xf32>
    %cst_31 = arith.constant dense<0.000000e+00> : vector<16xf32>
    %63 = vector.multi_reduction <add>, %62, %cst_31 [1] : vector<16x32xf32> to vector<16xf32>
    %64 = vector.shape_cast %63 : vector<16xf32> to vector<16x1xf32>
    %cst_32 = arith.constant 3.200000e+01 : f32
    %65 = vector.broadcast %cst_32 : f32 to vector<16x1xf32>
    %66 = arith.divf %64, %65 : vector<16x1xf32>
    %67 = vector.broadcast %59 : vector<16x1xf32> to vector<16x32xf32>
    %68 = arith.subf %53, %67 : vector<16x32xf32>
    %cst_33 = arith.constant 9.99999996E-13 : f32
    %69 = vector.broadcast %cst_33 : f32 to vector<16x1xf32>
    %70 = arith.addf %66, %69 : vector<16x1xf32>
    %71 = math.rsqrt %70 : vector<16x1xf32>
    %72 = vector.broadcast %71 : vector<16x1xf32> to vector<16x32xf32>
    %73 = arith.mulf %68, %72 : vector<16x32xf32>
    %74 = vector.broadcast %54 : vector<1x32xf32> to vector<16x32xf32>
    %75 = arith.mulf %73, %74 : vector<16x32xf32>
    %76 = vector.broadcast %55 : vector<1x32xf32> to vector<16x32xf32>
    %77 = arith.addf %75, %76 : vector<16x32xf32>
    %78 = arith.truncf %77 : vector<16x32xf32> to vector<16x32xbf16>
    %c0_34 = arith.constant 0 : index
    %c0_35 = arith.constant 0 : index
    %79 = vector.load %arg8[%c0_34, %c0_35] : memref<16x32xbf16, #tpu.memory_space<vmem>>, vector<16x32xbf16>
    tpu.vector_store %arg8[%c0_34, %c0_35], %78 {strides = array<i32>} : memref<16x32xbf16, #tpu.memory_space<vmem>>, vector<16x32xbf16>,
    return
  }
  func.func @transform_0(%arg0: i32) -> (i32, i32) {
    %c0_i32 = arith.constant 0 : i32
    %c0_i32_0 = arith.constant 0 : i32
    return %arg0, %c0_i32 : i32, i32
  }
  func.func @transform_1(%arg0: i32) -> (i32, i32) {
    %c0_i32 = arith.constant 0 : i32
    %c0_i32_0 = arith.constant 0 : i32
    %c0_i32_1 = arith.constant 0 : i32
    return %c0_i32, %c0_i32_0 : i32, i32
  }
  func.func @transform_2(%arg0: i32) -> (i32, i32) {
    %c0_i32 = arith.constant 0 : i32
    %c0_i32_0 = arith.constant 0 : i32
    %c0_i32_1 = arith.constant 0 : i32
    return %c0_i32, %c0_i32_0 : i32, i32
  }
  func.func @transform_3(%arg0: i32) -> (i32, i32) {
    %c0_i32 = arith.constant 0 : i32
    %c0_i32_0 = arith.constant 0 : i32
    %c0_i32_1 = arith.constant 0 : i32
    return %c0_i32, %c0_i32_0 : i32, i32
  }
  func.func @transform_4(%arg0: i32) -> (i32, i32) {
    %c0_i32 = arith.constant 0 : i32
    %c0_i32_0 = arith.constant 0 : i32
    %c0_i32_1 = arith.constant 0 : i32
    return %c0_i32, %c0_i32_0 : i32, i32
  }
  func.func @transform_5(%arg0: i32) -> (i32, i32) {
    %c0_i32 = arith.constant 0 : i32
    %c0_i32_0 = arith.constant 0 : i32
    %c0_i32_1 = arith.constant 0 : i32
    return %c0_i32, %c0_i32_0 : i32, i32
  }
  func.func @transform_6(%arg0: i32) -> (i32, i32) {
    %c0_i32 = arith.constant 0 : i32
    %c0_i32_0 = arith.constant 0 : i32
    %c0_i32_1 = arith.constant 0 : i32
    return %c0_i32, %c0_i32_0 : i32, i32
  }
  func.func @transform_7(%arg0: i32) -> (i32, i32) {
    %c0_i32 = arith.constant 0 : i32
    %c0_i32_0 = arith.constant 0 : i32
    return %arg0, %c0_i32 : i32, i32
  }
}

module attributes {stable_mosaic.version = 11 : i64} {
  func.func @_head_kernel(%arg0: i32, %arg1: memref<2x32xbf16, #tpu.memory_space<vmem>>, %arg2: memref<32x32xf32, #tpu.memory_space<vmem>>, %arg3: memref<1x32xf32, #tpu.memory_space<vmem>>, %arg4: memref<32x16xf32, #tpu.memory_space<vmem>>, %arg5: memref<2x16xf32, #tpu.memory_space<vmem>>) attributes {dimension_semantics = [#tpu.dimension_semantics<arbitrary>], iteration_bounds = array<i64: 1>, scalar_prefetch = 0 : i64, scratch_operands = 0 : i64, tpu.core_type = #tpu.core_type<tc>, window_params = [{pipeline_mode = #tpu.pipeline_mode<synchronous>, transform_indices = @transform_0, window_bounds = array<i64: 2, 32>}, {pipeline_mode = #tpu.pipeline_mode<synchronous>, transform_indices = @transform_1, window_bounds = array<i64: 32, 32>}, {pipeline_mode = #tpu.pipeline_mode<synchronous>, transform_indices = @transform_2, window_bounds = array<i64: 1, 32>}, {pipeline_mode = #tpu.pipeline_mode<synchronous>, transform_indices = @transform_3, window_bounds = array<i64: 32, 16>}, {pipeline_mode = #tpu.pipeline_mode<synchronous>, transform_indices = @transform_4, window_bounds = array<i64: 2, 16>}]} {
    %c0 = arith.constant 0 : index
    %c0_0 = arith.constant 0 : index
    %0 = vector.load %arg1[%c0, %c0_0] : memref<2x32xbf16, #tpu.memory_space<vmem>>, vector<2x32xbf16>
    %1 = arith.extf %0 : vector<2x32xbf16> to vector<2x32xf32>
    %c0_1 = arith.constant 0 : index
    %c0_2 = arith.constant 0 : index
    %2 = vector.load %arg2[%c0_1, %c0_2] : memref<32x32xf32, #tpu.memory_space<vmem>>, vector<32x32xf32>
    %cst = arith.constant dense<0.000000e+00> : vector<2x32xf32>
    %3 = tpu.matmul %1, %2, %cst {dimension_numbers = #tpu.dot_dimension_numbers<[1], [0], [0], [1], [0, 0, 1, 1], [], []>} : vector<2x32xf32>, vector<32x32xf32>, vector<2x32xf32> -> vector<2x32xf32>
    %c0_3 = arith.constant 0 : index
    %c0_4 = arith.constant 0 : index
    %4 = vector.load %arg3[%c0_3, %c0_4] : memref<1x32xf32, #tpu.memory_space<vmem>>, vector<1x32xf32>
    %5 = vector.broadcast %4 : vector<1x32xf32> to vector<2x32xf32>
    %6 = arith.addf %3, %5 : vector<2x32xf32>
    %7 = math.tanh %6 : vector<2x32xf32>
    %c0_5 = arith.constant 0 : index
    %c0_6 = arith.constant 0 : index
    %8 = vector.load %arg4[%c0_5, %c0_6] : memref<32x16xf32, #tpu.memory_space<vmem>>, vector<32x16xf32>
    %cst_7 = arith.constant dense<0.000000e+00> : vector<2x16xf32>
    %9 = tpu.matmul %7, %8, %cst_7 {dimension_numbers = #tpu.dot_dimension_numbers<[1], [0], [0], [1], [0, 0, 1, 1], [], []>} : vector<2x32xf32>, vector<32x16xf32>, vector<2x16xf32> -> vector<2x16xf32>
    %10 = arith.mulf %9, %9 : vector<2x16xf32>
    %cst_8 = arith.constant dense<0.000000e+00> : vector<2xf32>
    %11 = vector.multi_reduction <add>, %10, %cst_8 [1] : vector<2x16xf32> to vector<2xf32>
    %12 = vector.shape_cast %11 : vector<2xf32> to vector<2x1xf32>
    %13 = math.sqrt %12 : vector<2x1xf32>
    %cst_9 = arith.constant 9.99999996E-13 : f32
    %14 = vector.broadcast %cst_9 : f32 to vector<2x1xf32>
    %15 = arith.maximumf %13, %14 : vector<2x1xf32>
    %16 = vector.broadcast %15 : vector<2x1xf32> to vector<2x16xf32>
    %17 = arith.divf %9, %16 : vector<2x16xf32>
    %c0_10 = arith.constant 0 : index
    %c0_11 = arith.constant 0 : index
    %18 = vector.load %arg5[%c0_10, %c0_11] : memref<2x16xf32, #tpu.memory_space<vmem>>, vector<2x16xf32>
    tpu.vector_store %arg5[%c0_10, %c0_11], %17 {strides = array<i32>} : memref<2x16xf32, #tpu.memory_space<vmem>>, vector<2x16xf32>,
    return
  }
  func.func @transform_0(%arg0: i32) -> (i32, i32) {
    %c0_i32 = arith.constant 0 : i32
    %c0_i32_0 = arith.constant 0 : i32
    %c0_i32_1 = arith.constant 0 : i32
    return %c0_i32, %c0_i32_0 : i32, i32
  }
  func.func @transform_1(%arg0: i32) -> (i32, i32) {
    %c0_i32 = arith.constant 0 : i32
    %c0_i32_0 = arith.constant 0 : i32
    %c0_i32_1 = arith.constant 0 : i32
    return %c0_i32, %c0_i32_0 : i32, i32
  }
  func.func @transform_2(%arg0: i32) -> (i32, i32) {
    %c0_i32 = arith.constant 0 : i32
    %c0_i32_0 = arith.constant 0 : i32
    %c0_i32_1 = arith.constant 0 : i32
    return %c0_i32, %c0_i32_0 : i32, i32
  }
  func.func @transform_3(%arg0: i32) -> (i32, i32) {
    %c0_i32 = arith.constant 0 : i32
    %c0_i32_0 = arith.constant 0 : i32
    %c0_i32_1 = arith.constant 0 : i32
    return %c0_i32, %c0_i32_0 : i32, i32
  }
  func.func @transform_4(%arg0: i32) -> (i32, i32) {
    %c0_i32 = arith.constant 0 : i32
    %c0_i32_0 = arith.constant 0 : i32
    %c0_i32_1 = arith.constant 0 : i32
    return %c0_i32, %c0_i32_0 : i32, i32
  }
}

</mosaic_0001>

<llo_original>
// kernel: pretrained_bert_forward.8
$region0: #{pretrained_bert_forward.8}
  #allocation0 [shape = 'u32[]', space=smem, size = 0x4, offset = 0x4, fixed_abs, tag = 'smem constant byte address 0x4 - core index']
  #allocation1 [shape = 'u32[144,128]{1,0:T(1,128)}', space=vmem, size = 0x12000, scoped, tag = 'internal scratch']
  %s0 = inlined_call_operand.vmem [shape: f32[16,32], index: 0, kind: input, shape index: {}]
  %s1 = inlined_call_operand.vmem [shape: f32[1,32], index: 1, kind: input, shape index: {}]
  %s2 = inlined_call_operand.vmem [shape: f32[1,32], index: 2, kind: input, shape index: {}]
  %s3 = inlined_call_operand.vmem [shape: bf16[16,32], index: 3, kind: output, shape index: {}]
  %s4 = sld [smem:[#allocation0]]
  $region22: #{pretrained_bert_forward.8} parent=0
    _
  %s6 = ssub.s32 1, %s4
  %s7 = scalar_select 0, %s6, %s4
  // Predicated region
  $region2: #{pretrained_bert_forward.8} parent=0 // pred_check
    _
  $region3: #{pretrained_bert_forward.8} parent=0 // pred_check_branch
    %9 = sbr.rel (0) target = $region5
  $region4: #{pretrained_bert_forward.8} parent=0 // pred_region
    _
  $region5: #{pretrained_bert_forward.8} parent=0 // pred_fallthru
    _
  // Predicated region
  $region6: #{pretrained_bert_forward.8} parent=0 // pred_check
    _
  $region7: #{pretrained_bert_forward.8} parent=0 // pred_check_branch
    %11 = sbr.rel (0) target = $region9
  $region8: #{pretrained_bert_forward.8} parent=0 // pred_region
    _
  $region9: #{pretrained_bert_forward.8} parent=0 // pred_fallthru
    _
  // Predicated region
  $region10: #{pretrained_bert_forward.8} parent=0 // pred_check
    _
  $region11: #{pretrained_bert_forward.8} parent=0 // pred_check_branch
    %13 = sbr.rel (0) target = $region13
  $region12: #{pretrained_bert_forward.8} parent=0 // pred_region
    _
  $region13: #{pretrained_bert_forward.8} parent=0 // pred_fallthru
    _
  %v14 = vld [vmem:[%s0] sm:$0xff]
  %v15 = vld [vmem:[%s0 + $0x8] sm:$0xff]
  %v16 = vld [vmem:[%s1] sm:$0x1]
  %v17 = vld [vmem:[%s2] sm:$0x1]
  %vm18 = vcmask 261120
  %v19 = vsel %vm18, %v14, 0.0
  %20 = vadd.xlane.f32.xlu0 %v19
  %v21 = vpop.xlane.xlu0 %20
  %v22 = vsel %vm18, %v15, 0.0
  %23 = vadd.xlane.f32.xlu0 %v22
  %v24 = vpop.xlane.xlu0 %23
  %v25 = vrcp.pop 32.0
  %v26 = vmul.f32 %v21, %v25
  %v27 = vmul.f32 %v24, %v25
  %v28 = vsub.f32 %v14, %v26
  %v29 = vsub.f32 %v15, %v27
  %v30 = vmul.f32 %v28, %v28
  %v31 = vmul.f32 %v29, %v29
  %v32 = vsel %vm18, %v30, 0.0
  %33 = vadd.xlane.f32.xlu0 %v32
  %v34 = vpop.xlane.xlu0 %33
  %v35 = vsel %vm18, %v31, 0.0
  %36 = vadd.xlane.f32.xlu0 %v35
  %v37 = vpop.xlane.xlu0 %36
  %v38 = vmul.f32 %v34, %v25
  %v39 = vmul.f32 %v37, %v25
  %v40 = vadd.f32 %v38, 1e-12
  %v41 = vadd.f32 %v39, 1e-12
  %v42 = vrsqrt.pop %v40
  %v43 = vrsqrt.pop %v41
  %v44 = vmul.f32 %v28, %v42
  %v45 = vmul.f32 %v29, %v43
  %v47 = vlaneseq
  %v48 = vshrl.u32 %v47, 7
  %v49 = vsub.s32 0, %v48
  %v50 = vrot.slane %v16, %v49
  %v52 = vmul.f32 %v44, %v50
  %v53 = vmul.f32 %v45, %v50
  %v55 = vlaneseq
  %v56 = vshrl.u32 %v55, 7
  %v57 = vsub.s32 0, %v56
  %v58 = vrot.slane %v17, %v57
  %v60 = vadd.f32 %v52, %v58
  %v61 = vadd.f32 %v53, %v58
  %v62 = vpack.c.bf16 %v61, %v60
  %v64 = vunpack.c.l.b16 %v62
  %v65 = vunpack.c.h.b16 %v62
  %v66 = vpack.c.b16 %v64, %v64
  %v67 = vpack.c.b16 %v65, %v65
  %vm70 = vcmask 257024
  %71 = vst.msk [vmem:[%s3] sm:$0xf] %vm70, %v66
  %72 = vst.msk [vmem:[%s3 + $0x4] sm:$0xf] %vm70, %v67
  // Predicated region
  $region14: #{pretrained_bert_forward.8} parent=0 // pred_check
    _
  $region15: #{pretrained_bert_forward.8} parent=0 // pred_check_branch
    %74 = sbr.rel (0) target = $region17
  $region16: #{pretrained_bert_forward.8} parent=0 // pred_region
    _
  $region17: #{pretrained_bert_forward.8} parent=0 // pred_fallthru
    _
  // Predicated region
  $region18: #{pretrained_bert_forward.8} parent=0 // pred_check
    _
  $region19: #{pretrained_bert_forward.8} parent=0 // pred_check_branch
    %76 = sbr.rel (0) target = $region21
  $region20: #{pretrained_bert_forward.8} parent=0 // pred_region
    _
  $region21: #{pretrained_bert_forward.8} parent=0 // pred_fallthru
    _

// kernel: pretrained_bert_forward.9
$region0: #{pretrained_bert_forward.9}
  #allocation0 [shape = 'u32[]', space=smem, size = 0x4, offset = 0x4, fixed_abs, tag = 'smem constant byte address 0x4 - core index']
  #allocation1 [shape = 'u32[144,128]{1,0:T(1,128)}', space=vmem, size = 0x12000, scoped, tag = 'internal scratch']
  %s0 = inlined_call_operand.vmem [shape: bf16[16,32], index: 0, kind: input, shape index: {}]
  %s1 = inlined_call_operand.vmem [shape: bf16[32,96], index: 1, kind: input, shape index: {}]
  %s2 = inlined_call_operand.vmem [shape: f32[1,96], index: 2, kind: input, shape index: {}]
  %s3 = inlined_call_operand.vmem [shape: bf16[16,96], index: 3, kind: output, shape index: {}]
  %s4 = sld [smem:[#allocation0]]
  $region22: #{pretrained_bert_forward.9} parent=0
    _
  %s6 = ssub.s32 1, %s4
  %s7 = scalar_select 0, %s6, %s4
  // Predicated region
  $region2: #{pretrained_bert_forward.9} parent=0 // pred_check
    _
  $region3: #{pretrained_bert_forward.9} parent=0 // pred_check_branch
    %9 = sbr.rel (0) target = $region5
  $region4: #{pretrained_bert_forward.9} parent=0 // pred_region
    _
  $region5: #{pretrained_bert_forward.9} parent=0 // pred_fallthru
    _
  // Predicated region
  $region6: #{pretrained_bert_forward.9} parent=0 // pred_check
    _
  $region7: #{pretrained_bert_forward.9} parent=0 // pred_check_branch
    %11 = sbr.rel (0) target = $region9
  $region8: #{pretrained_bert_forward.9} parent=0 // pred_region
    _
  $region9: #{pretrained_bert_forward.9} parent=0 // pred_fallthru
    _
  // Predicated region
  $region10: #{pretrained_bert_forward.9} parent=0 // pred_check
    _
  $region11: #{pretrained_bert_forward.9} parent=0 // pred_check_branch
    %13 = sbr.rel (0) target = $region13
  $region12: #{pretrained_bert_forward.9} parent=0 // pred_region
    _
  $region13: #{pretrained_bert_forward.9} parent=0 // pred_fallthru
    _
  %v15 = vld [vmem:[%s0] sm:$0xf]
  %v16 = vld [vmem:[%s0 + $0x4] sm:$0xf]
  %v17 = vld [vmem:[%s1] sm:$0xf]
  %v18 = vld [vmem:[%s1 + $0x4] sm:$0xf]
  %v19 = vld [vmem:[%s1 + $0x8] sm:$0xf]
  %v20 = vld [vmem:[%s1 + $0xc] sm:$0xf]
  %v21 = vld [vmem:[%s2] sm:$0x1]
  %v23 = vlaneseq
  %v24 = vshrl.u32 %v23, 7
  %v25 = vsub.s32 0, %v24
  %v26 = vrot.slane %v21, %v25
  %v30 = vunpack.c.l.b16 %v15
  %v31 = vunpack.c.l.b16 %v16
  %v32 = vpack.c.b16 %v31, %v30
  %v37 = vunpack.c.l.b16 %v17
  %v38 = vunpack.c.l.b16 %v18
  %v39 = vunpack.c.l.b16 %v19
  %v40 = vunpack.c.l.b16 %v20
  %v41 = vpack.c.b16 %v38, %v37
  %v42 = vpack.c.b16 %v40, %v39
  %vm45 = vcmask 261120
  %v47 = vsel %vm45, %v32, 0
  %49 = vmatprep.subr.bf16.mxu0 0
  %50 = vmatpush1.bf16.msra.mxu0 %v41
  %51 = vmatprep.subr.bf16.mxu0 0
  %52 = vmatpush1.bf16.msra.mxu0 %v42
  %53 = vmatprep.subr.bf16.mxu0 0
  %54 = vmatpush1.bf16.msra.mxu0 0
  %55 = vmatprep.subr.bf16.mxu0 0
  %56 = vmatpush1.bf16.msra.mxu0 0
  %57 = vmatprep.subr.bf16.mxu0 0
  %58 = vmatpush1.bf16.msra.mxu0 0
  %59 = vmatprep.subr.bf16.mxu0 0
  %60 = vmatpush1.bf16.msra.mxu0 0
  %61 = vmatprep.subr.bf16.mxu0 0
  %62 = vmatpush1.bf16.msra.mxu0 0
  %63 = vmatprep.subr.bf16.mxu0 0
  %64 = vmatpush1.bf16.msra.mxu0 0
  %65 = vmatprep.subr.bf16.mxu0 0
  %66 = vmatpush1.bf16.msra.mxu0 0
  %67 = vmatprep.subr.bf16.mxu0 0
  %68 = vmatpush1.bf16.msra.mxu0 0
  %69 = vmatprep.subr.bf16.mxu0 0
  %70 = vmatpush1.bf16.msra.mxu0 0
  %71 = vmatprep.subr.bf16.mxu0 0
  %72 = vmatpush1.bf16.msra.mxu0 0
  %73 = vmatprep.subr.bf16.mxu0 0
  %74 = vmatpush1.bf16.msra.mxu0 0
  %75 = vmatprep.subr.bf16.mxu0 0
  %76 = vmatpush1.bf16.msra.mxu0 0
  %77 = vmatprep.subr.bf16.mxu0 0
  %78 = vmatpush1.bf16.msra.mxu0 0
  %79 = vmatprep.subr.bf16.mxu0 0
  %80 = vmatpush1.bf16.msra.mxu0 0
  %81 = vmatprep.mubr.bf16.mxu0 0
  %82 = vmatmul.mubr.bf16.gmra.mrb[0].mxu0 %v47
  %v83 = vpop.f32.mrb[0].mxu0
  %v84 = vadd.f32 %v26, %v83
  %v85 = vpop.f32.mrb[0].mxu0
  %v86 = vpop.f32.mrb[0].mxu0
  %v87 = vadd.f32 %v26, %v86
  %v88 = vpop.f32.mrb[0].mxu0
  %89 = vdwg.mxu0
  %v90 = vpack.c.bf16 %v87, %v84
  %v92 = vunpack.c.l.b16 %v90
  %v93 = vunpack.c.h.b16 %v90
  %v94 = vpack.c.b16 %v92, %v92
  %v95 = vpack.c.b16 %v93, %v93
  %vm98 = vcmask 781312
  %99 = vst.msk [vmem:[%s3] sm:$0xf] %vm98, %v94
  %100 = vst.msk [vmem:[%s3 + $0x4] sm:$0xf] %vm98, %v95
  // Predicated region
  $region14: #{pretrained_bert_forward.9} parent=0 // pred_check
    _
  $region15: #{pretrained_bert_forward.9} parent=0 // pred_check_branch
    %102 = sbr.rel (0) target = $region17
  $region16: #{pretrained_bert_forward.9} parent=0 // pred_region
    _
  $region17: #{pretrained_bert_forward.9} parent=0 // pred_fallthru
    _
  // Predicated region
  $region18: #{pretrained_bert_forward.9} parent=0 // pred_check
    _
  $region19: #{pretrained_bert_forward.9} parent=0 // pred_check_branch
    %104 = sbr.rel (0) target = $region21
  $region20: #{pretrained_bert_forward.9} parent=0 // pred_region
    _
  $region21: #{pretrained_bert_forward.9} parent=0 // pred_fallthru
    _

// kernel: pretrained_bert_forward.11
$region0: #{pretrained_bert_forward.11}
  #allocation0 [shape = 'u32[]', space=smem, size = 0x4, offset = 0x4, fixed_abs, tag = 'smem constant byte address 0x4 - core index']
  #allocation1 [shape = 'u32[144,128]{1,0:T(1,128)}', space=vmem, size = 0x12000, scoped, tag = 'internal scratch']
  %s0 = inlined_call_operand.vmem [shape: bf16[16,32], index: 0, kind: input, shape index: {}]
  %s1 = inlined_call_operand.vmem [shape: bf16[32,64], index: 1, kind: input, shape index: {}]
  %s2 = inlined_call_operand.vmem [shape: f32[1,64], index: 2, kind: input, shape index: {}]
  %s3 = inlined_call_operand.vmem [shape: bf16[64,32], index: 3, kind: input, shape index: {}]
  %s4 = inlined_call_operand.vmem [shape: f32[1,32], index: 4, kind: input, shape index: {}]
  %s5 = inlined_call_operand.vmem [shape: f32[1,32], index: 5, kind: input, shape index: {}]
  %s6 = inlined_call_operand.vmem [shape: f32[1,32], index: 6, kind: input, shape index: {}]
  %s7 = inlined_call_operand.vmem [shape: bf16[16,32], index: 7, kind: output, shape index: {}]
  %s8 = sld [smem:[#allocation0]]
  $region38: #{pretrained_bert_forward.11} parent=0
    _
  %s10 = ssub.s32 1, %s8
  %s11 = scalar_select 0, %s10, %s8
  // Predicated region
  $region2: #{pretrained_bert_forward.11} parent=0 // pred_check
    _
  $region3: #{pretrained_bert_forward.11} parent=0 // pred_check_branch
    %13 = sbr.rel (0) target = $region5
  $region4: #{pretrained_bert_forward.11} parent=0 // pred_region
    _
  $region5: #{pretrained_bert_forward.11} parent=0 // pred_fallthru
    _
  // Predicated region
  $region6: #{pretrained_bert_forward.11} parent=0 // pred_check
    _
  $region7: #{pretrained_bert_forward.11} parent=0 // pred_check_branch
    %15 = sbr.rel (0) target = $region9
  $region8: #{pretrained_bert_forward.11} parent=0 // pred_region
    _
  $region9: #{pretrained_bert_forward.11} parent=0 // pred_fallthru
    _
  // Predicated region
  $region10: #{pretrained_bert_forward.11} parent=0 // pred_check
    _
  $region11: #{pretrained_bert_forward.11} parent=0 // pred_check_branch
    %17 = sbr.rel (0) target = $region13
  $region12: #{pretrained_bert_forward.11} parent=0 // pred_region
    _
  $region13: #{pretrained_bert_forward.11} parent=0 // pred_fallthru
    _
  // Predicated region
  $region14: #{pretrained_bert_forward.11} parent=0 // pred_check
    _
  $region15: #{pretrained_bert_forward.11} parent=0 // pred_check_branch
    %19 = sbr.rel (0) target = $region17
  $region16: #{pretrained_bert_forward.11} parent=0 // pred_region
    _
  $region17: #{pretrained_bert_forward.11} parent=0 // pred_fallthru
    _
  // Predicated region
  $region18: #{pretrained_bert_forward.11} parent=0 // pred_check
    _
  $region19: #{pretrained_bert_forward.11} parent=0 // pred_check_branch
    %21 = sbr.rel (0) target = $region21
  $region20: #{pretrained_bert_forward.11} parent=0 // pred_region
    _
  $region21: #{pretrained_bert_forward.11} parent=0 // pred_fallthru
    _
  // Predicated region
  $region22: #{pretrained_bert_forward.11} parent=0 // pred_check
    _
  $region23: #{pretrained_bert_forward.11} parent=0 // pred_check_branch
    %23 = sbr.rel (0) target = $region25
  $region24: #{pretrained_bert_forward.11} parent=0 // pred_region
    _
  $region25: #{pretrained_bert_forward.11} parent=0 // pred_fallthru
    _
  // Predicated region
  $region26: #{pretrained_bert_forward.11} parent=0 // pred_check
    _
  $region27: #{pretrained_bert_forward.11} parent=0 // pred_check_branch
    %25 = sbr.rel (0) target = $region29
  $region28: #{pretrained_bert_forward.11} parent=0 // pred_region
    _
  $region29: #{pretrained_bert_forward.11} parent=0 // pred_fallthru
    _
  %v27 = vld [vmem:[%s0] sm:$0xf]
  %v28 = vld [vmem:[%s0 + $0x4] sm:$0xf]
  %v29 = vld [vmem:[%s1] sm:$0xf]
  %v30 = vld [vmem:[%s1 + $0x4] sm:$0xf]
  %v31 = vld [vmem:[%s1 + $0x8] sm:$0xf]
  %v32 = vld [vmem:[%s1 + $0xc] sm:$0xf]
  %v33 = vld [vmem:[%s2] sm:$0x1]
  %v35 = vlaneseq
  %v36 = vshrl.u32 %v35, 7
  %v37 = vsub.s32 0, %v36
  %v38 = vrot.slane %v33, %v37
  %v42 = vunpack.c.l.b16 %v27
  %v43 = vunpack.c.l.b16 %v28
  %v44 = vpack.c.b16 %v43, %v42
  %v49 = vunpack.c.l.b16 %v29
  %v50 = vunpack.c.l.b16 %v30
  %v51 = vunpack.c.l.b16 %v31
  %v52 = vunpack.c.l.b16 %v32
  %v53 = vpack.c.b16 %v50, %v49
  %v54 = vpack.c.b16 %v52, %v51
  %vm57 = vcmask 261120
  %v59 = vsel %vm57, %v44, 0
  %61 = vmatprep.subr.bf16.mxu0 0
  %62 = vmatpush1.bf16.msra.mxu0 %v53
  %63 = vmatprep.subr.bf16.mxu0 0
  %64 = vmatpush1.bf16.msra.mxu0 %v54
  %65 = vmatprep.subr.bf16.mxu0 0
  %66 = vmatpush1.bf16.msra.mxu0 0
  %67 = vmatprep.subr.bf16.mxu0 0
  %68 = vmatpush1.bf16.msra.mxu0 0
  %69 = vmatprep.subr.bf16.mxu0 0
  %70 = vmatpush1.bf16.msra.mxu0 0
  %71 = vmatprep.subr.bf16.mxu0 0
  %72 = vmatpush1.bf16.msra.mxu0 0
  %73 = vmatprep.subr.bf16.mxu0 0
  %74 = vmatpush1.bf16.msra.mxu0 0
  %75 = vmatprep.subr.bf16.mxu0 0
  %76 = vmatpush1.bf16.msra.mxu0 0
  %77 = vmatprep.subr.bf16.mxu0 0
  %78 = vmatpush1.bf16.msra.mxu0 0
  %79 = vmatprep.subr.bf16.mxu0 0
  %80 = vmatpush1.bf16.msra.mxu0 0
  %81 = vmatprep.subr.bf16.mxu0 0
  %82 = vmatpush1.bf16.msra.mxu0 0
  %83 = vmatprep.subr.bf16.mxu0 0
  %84 = vmatpush1.bf16.msra.mxu0 0
  %85 = vmatprep.subr.bf16.mxu0 0
  %86 = vmatpush1.bf16.msra.mxu0 0
  %87 = vmatprep.subr.bf16.mxu0 0
  %88 = vmatpush1.bf16.msra.mxu0 0
  %89 = vmatprep.subr.bf16.mxu0 0
  %90 = vmatpush1.bf16.msra.mxu0 0
  %91 = vmatprep.subr.bf16.mxu0 0
  %92 = vmatpush1.bf16.msra.mxu0 0
  %93 = vmatprep.mubr.bf16.mxu0 0
  %94 = vmatmul.mubr.bf16.gmra.mrb[0].mxu0 %v59
  %v95 = vpop.f32.mrb[0].mxu0
  %v96 = vadd.f32 %v38, %v95
  %v97 = vpop.f32.mrb[0].mxu0
  %v98 = vpop.f32.mrb[0].mxu0
  %v99 = vadd.f32 %v38, %v98
  %v100 = vpop.f32.mrb[0].mxu0
  %101 = vdwg.mxu0
  %v102 = vmul.f32 %v96, 0.5
  %v103 = vmul.f32 %v99, 0.5
  %v104 = vmul.f32 %v96, 0.70710677
  %v105 = vmul.f32 %v99, 0.70710677
  %v106 = vand.u32 2147483647, %v104
  %v107 = vand.u32 2147483647, %v105
  %v108 = vmul.f32 %v106, 0.3275911
  %v109 = vmul.f32 %v107, 0.3275911
  %v110 = vadd.f32 %v108, 1.0
  %v111 = vadd.f32 %v109, 1.0
  %v112 = vrcp.pop %v110
  %v113 = vmul.f32 1.0, %v112
  %v114 = vrcp.pop %v111
  %v115 = vmul.f32 1.0, %v114
  %v116 = vmul.f32 %v113, 1.0614054
  %v117 = vmul.f32 %v115, 1.0614054
  %v118 = vadd.f32 %v116, -1.4531521
  %v119 = vadd.f32 %v117, -1.4531521
  %v120 = vmul.f32 %v113, %v118
  %v121 = vmul.f32 %v115, %v119
  %v122 = vadd.f32 %v120, 1.4214138
  %v123 = vadd.f32 %v121, 1.4214138
  %v124 = vmul.f32 %v113, %v122
  %v125 = vmul.f32 %v115, %v123
  %v126 = vadd.f32 %v124, -0.28449672
  %v127 = vadd.f32 %v125, -0.28449672
  %v128 = vmul.f32 %v113, %v126
  %v129 = vmul.f32 %v115, %v127
  %v130 = vadd.f32 %v128, 0.2548296
  %v131 = vadd.f32 %v129, 0.2548296
  %v132 = vmul.f32 %v113, %v130
  %v133 = vmul.f32 %v115, %v131
  %v134 = vsub.f32 0.0, %v106
  %v135 = vsub.f32 0.0, %v107
  %v136 = vmul.f32 %v134, %v106
  %v137 = vmul.f32 %v135, %v107
  %v138 = vmul.f32 %v136, 1.442695
  %v139 = vpow.pop %v138
  %v140 = vmul.f32 %v137, 1.442695
  %v141 = vpow.pop %v140
  %v142 = vmul.f32 %v132, %v139
  %v143 = vmul.f32 %v133, %v141
  %v144 = vsub.f32 1.0, %v142
  %v145 = vsub.f32 1.0, %v143
  %vm146 = vcmp.ge.f32.partialorder %v104, 0.0
  %vm147 = vcmp.ge.f32.partialorder %v105, 0.0
  %v148 = vsub.f32 0.0, %v144
  %v149 = vsub.f32 0.0, %v145
  %v150 = vsel %vm146, %v144, %v148
  %v151 = vsel %vm147, %v145, %v149
  %v152 = vadd.f32 %v150, 1.0
  %v153 = vadd.f32 %v151, 1.0
  %v154 = vmul.f32 %v102, %v152
  %v155 = vmul.f32 %v103, %v153
  %v156 = vpack.c.bf16 %v155, %v154
  %v157 = vld [vmem:[%s3] sm:$0xf]
  %v158 = vld [vmem:[%s3 + $0x4] sm:$0xf]
  %v159 = vld [vmem:[%s3 + $0x8] sm:$0xf]
  %v160 = vld [vmem:[%s3 + $0xc] sm:$0xf]
  %v161 = vld [vmem:[%s3 + $0x10] sm:$0xf]
  %v162 = vld [vmem:[%s3 + $0x14] sm:$0xf]
  %v163 = vld [vmem:[%s3 + $0x18] sm:$0xf]
  %v164 = vld [vmem:[%s3 + $0x1c] sm:$0xf]
  %v165 = vld [vmem:[%s4] sm:$0x1]
  %v167 = vlaneseq
  %v168 = vshrl.u32 %v167, 7
  %v169 = vsub.s32 0, %v168
  %v170 = vrot.slane %v165, %v169
  %v180 = vunpack.c.l.b16 %v157
  %v181 = vunpack.c.l.b16 %v158
  %v182 = vunpack.c.l.b16 %v159
  %v183 = vunpack.c.l.b16 %v160
  %v184 = vunpack.c.l.b16 %v161
  %v185 = vunpack.c.l.b16 %v162
  %v186 = vunpack.c.l.b16 %v163
  %v187 = vunpack.c.l.b16 %v164
  %v188 = vpack.c.b16 %v181, %v180
  %v189 = vpack.c.b16 %v183, %v182
  %v190 = vpack.c.b16 %v185, %v184
  %v191 = vpack.c.b16 %v187, %v186
  %vm196 = vcmask 523264
  %v198 = vsel %vm196, %v156, 0
  %200 = vmatprep.subr.bf16.mxu0 0
  %201 = vmatpush1.bf16.msra.mxu0 %v188
  %202 = vmatprep.subr.bf16.mxu0 0
  %203 = vmatpush1.bf16.msra.mxu0 %v189
  %204 = vmatprep.subr.bf16.mxu0 0
  %205 = vmatpush1.bf16.msra.mxu0 %v190
  %206 = vmatprep.subr.bf16.mxu0 0
  %207 = vmatpush1.bf16.msra.mxu0 %v191
  %208 = vmatprep.subr.bf16.mxu0 0
  %209 = vmatpush1.bf16.msra.mxu0 0
  %210 = vmatprep.subr.bf16.mxu0 0
  %211 = vmatpush1.bf16.msra.mxu0 0
  %212 = vmatprep.subr.bf16.mxu0 0
  %213 = vmatpush1.bf16.msra.mxu0 0
  %214 = vmatprep.subr.bf16.mxu0 0
  %215 = vmatpush1.bf16.msra.mxu0 0
  %216 = vmatprep.subr.bf16.mxu0 0
  %217 = vmatpush1.bf16.msra.mxu0 0
  %218 = vmatprep.subr.bf16.mxu0 0
  %219 = vmatpush1.bf16.msra.mxu0 0
  %220 = vmatprep.subr.bf16.mxu0 0
  %221 = vmatpush1.bf16.msra.mxu0 0
  %222 = vmatprep.subr.bf16.mxu0 0
  %223 = vmatpush1.bf16.msra.mxu0 0
  %224 = vmatprep.subr.bf16.mxu0 0
  %225 = vmatpush1.bf16.msra.mxu0 0
  %226 = vmatprep.subr.bf16.mxu0 0
  %227 = vmatpush1.bf16.msra.mxu0 0
  %228 = vmatprep.subr.bf16.mxu0 0
  %229 = vmatpush1.bf16.msra.mxu0 0
  %230 = vmatprep.subr.bf16.mxu0 0
  %231 = vmatpush1.bf16.msra.mxu0 0
  %232 = vmatprep.mubr.bf16.mxu0 0
  %233 = vmatmul.mubr.bf16.gmra.mrb[0].mxu0 %v198
  %v234 = vpop.f32.mrb[0].mxu0
  %v235 = vadd.f32 %v170, %v234
  %v236 = vpop.f32.mrb[0].mxu0
  %v237 = vpop.f32.mrb[0].mxu0
  %v238 = vadd.f32 %v170, %v237
  %v239 = vpop.f32.mrb[0].mxu0
  %240 = vdwg.mxu0
  %v241 = vunpack.c.l.bf16 %v27
  %v242 = vunpack.c.l.bf16 %v28
  %v243 = vadd.f32 %v241, %v235
  %v244 = vadd.f32 %v242, %v238
  %v245 = vld [vmem:[%s5] sm:$0x1]
  %v246 = vld [vmem:[%s6] sm:$0x1]
  %v247 = vsel %vm57, %v243, 0.0
  %248 = vadd.xlane.f32.xlu0 %v247
  %v249 = vpop.xlane.xlu0 %248
  %v250 = vsel %vm57, %v244, 0.0
  %251 = vadd.xlane.f32.xlu0 %v250
  %v252 = vpop.xlane.xlu0 %251
  %v253 = vrcp.pop 32.0
  %v254 = vmul.f32 %v249, %v253
  %v255 = vmul.f32 %v252, %v253
  %v256 = vsub.f32 %v243, %v254
  %v257 = vsub.f32 %v244, %v255
  %v258 = vmul.f32 %v256, %v256
  %v259 = vmul.f32 %v257, %v257
  %v260 = vsel %vm57, %v258, 0.0
  %261 = vadd.xlane.f32.xlu0 %v260
  %v262 = vpop.xlane.xlu0 %261
  %v263 = vsel %vm57, %v259, 0.0
  %264 = vadd.xlane.f32.xlu0 %v263
  %v265 = vpop.xlane.xlu0 %264
  %v266 = vmul.f32 %v262, %v253
  %v267 = vmul.f32 %v265, %v253
  %v268 = vadd.f32 %v266, 1e-12
  %v269 = vadd.f32 %v267, 1e-12
  %v270 = vrsqrt.pop %v268
  %v271 = vrsqrt.pop %v269
  %v272 = vmul.f32 %v256, %v270
  %v273 = vmul.f32 %v257, %v271
  %v275 = vlaneseq
  %v276 = vshrl.u32 %v275, 7
  %v277 = vsub.s32 0, %v276
  %v278 = vrot.slane %v245, %v277
  %v280 = vmul.f32 %v272, %v278
  %v281 = vmul.f32 %v273, %v278
  %v283 = vlaneseq
  %v284 = vshrl.u32 %v283, 7
  %v285 = vsub.s32 0, %v284
  %v286 = vrot.slane %v246, %v285
  %v288 = vadd.f32 %v280, %v286
  %v289 = vadd.f32 %v281, %v286
  %v290 = vpack.c.bf16 %v289, %v288
  %v292 = vunpack.c.l.b16 %v290
  %v293 = vunpack.c.h.b16 %v290
  %v294 = vpack.c.b16 %v292, %v292
  %v295 = vpack.c.b16 %v293, %v293
  %vm298 = vcmask 257024
  %299 = vst.msk [vmem:[%s7] sm:$0xf] %vm298, %v294
  %300 = vst.msk [vmem:[%s7 + $0x4] sm:$0xf] %vm298, %v295
  // Predicated region
  $region30: #{pretrained_bert_forward.11} parent=0 // pred_check
    _
  $region31: #{pretrained_bert_forward.11} parent=0 // pred_check_branch
    %302 = sbr.rel (0) target = $region33
  $region32: #{pretrained_bert_forward.11} parent=0 // pred_region
    _
  $region33: #{pretrained_bert_forward.11} parent=0 // pred_fallthru
    _
  // Predicated region
  $region34: #{pretrained_bert_forward.11} parent=0 // pred_check
    _
  $region35: #{pretrained_bert_forward.11} parent=0 // pred_check_branch
    %304 = sbr.rel (0) target = $region37
  $region36: #{pretrained_bert_forward.11} parent=0 // pred_region
    _
  $region37: #{pretrained_bert_forward.11} parent=0 // pred_fallthru
    _

// kernel: pretrained_bert_forward.10
$region0: #{pretrained_bert_forward.10}
  #allocation0 [shape = 'u32[]', space=smem, size = 0x4, offset = 0x4, fixed_abs, tag = 'smem constant byte address 0x4 - core index']
  #allocation1 [shape = 'u32[144,128]{1,0:T(1,128)}', space=vmem, size = 0x12000, scoped, tag = 'internal scratch']
  %s0 = inlined_call_operand.vmem [shape: bf16[2,8,96], index: 0, kind: input, shape index: {}]
  %s1 = inlined_call_operand.vmem [shape: f32[2,1,8], index: 1, kind: input, shape index: {}]
  %s2 = inlined_call_operand.vmem [shape: bf16[2,8,32], index: 2, kind: input, shape index: {}]
  %s3 = inlined_call_operand.vmem [shape: bf16[32,32], index: 3, kind: input, shape index: {}]
  %s4 = inlined_call_operand.vmem [shape: f32[1,32], index: 4, kind: input, shape index: {}]
  %s5 = inlined_call_operand.vmem [shape: f32[1,32], index: 5, kind: input, shape index: {}]
  %s6 = inlined_call_operand.vmem [shape: f32[1,32], index: 6, kind: input, shape index: {}]
  %s7 = inlined_call_operand.vmem [shape: bf16[2,8,32], index: 7, kind: output, shape index: {}]
  %s8 = sld [smem:[#allocation0]]
  $region61: #{pretrained_bert_forward.10} parent=0
    _
  %s10 = ssub.s32 1, %s8
  %s11 = scalar_select 0, %s10, %s8
  loop: start=0, step=1, limit=4
  $region2: #{pretrained_bert_forward.10} parent=0 // loop_pre_header
    _
  $region3: #{pretrained_bert_forward.10} parent=0 // loop_header
    %s13 = sphi 0, %s17
    %p14 = scmp.ge.s32.totalorder %s13, 4
    %s23 = sphi 0, %s25
    %s26 = sphi 0, %s23
    %s27 = sphi 0, %s26
    %s43 = sphi 0, %s27
    %s49 = sphi 0, %s51
    %s52 = sphi 0, %s49
    %s53 = sphi 0, %s52
    %s69 = sphi 0, %s53
    %s75 = sphi 0, %s77
    %s78 = sphi 0, %s75
    %s79 = sphi 0, %s78
    %s95 = sphi 0, %s79
    %s99 = sphi 0, %s99
    %s101 = sphi 0, %s99
    %s102 = sphi 0, %s101
    %s116 = sphi 0, %s102
    %s120 = sphi 0, %s120
    %s122 = sphi 0, %s120
    %s123 = sphi 0, %s122
    %s137 = sphi 0, %s123
    %s141 = sphi 0, %s141
    %s143 = sphi 0, %s141
    %s144 = sphi 0, %s143
    %s158 = sphi 0, %s144
    %s162 = sphi 0, %s162
    %s164 = sphi 0, %s162
    %s165 = sphi 0, %s164
    %s179 = sphi 0, %s165
    %s185 = sphi 0, %s187
    %s188 = sphi 0, %s185
    %s189 = sphi 0, %s188
    %s205 = sphi 0, %s189
  $region4: #{pretrained_bert_forward.10} parent=0 // loop_header_branch
    %16 = sbr.rel (%p14) target = $region8
  $region5: #{pretrained_bert_forward.10} parent=0 // loop_body
    %s18 = ssub.s32 %s13, 1
    %s19 = ssub.s32 %s13, 2
    %s20 = sadd.s32 %s13, 1
    %s21 = ssub.s32 %s13, %s20
    %p22 = scmp.eq.s32.totalorder %s21, 0
    %s24 = sadd.s32 %s23, 1
    %s25 = scalar_select %p22, %s23, %s24
    %p28 = pneg %p22
    %p29 = scmp.eq.s32.totalorder %s13, 1
    %p30 = por %p28, %p29
    %p31 = scmp.ne.s32.totalorder %s23, %s26
    %p32 = scmp.eq.s32.totalorder %s13, 0
    %p33 = por %p31, %p32
    %p34 = scmp.ne.s32.totalorder %s23, %s26
    %p35 = scmp.eq.s32.totalorder %s18, 1
    %p36 = por %p34, %p35
    %p37 = scmp.ne.s32.totalorder %s26, %s27
    %p38 = scmp.eq.s32.totalorder %s18, 0
    %p39 = por %p37, %p38
    %p40 = scmp.ne.s32.totalorder %s26, %s27
    %p41 = scmp.eq.s32.totalorder %s19, 1
    %p42 = por %p40, %p41
    %p44 = scmp.ne.s32.totalorder %s27, %s43
    %p45 = scmp.eq.s32.totalorder %s19, 0
    %p46 = por %p44, %p45
    %s47 = ssub.s32 %s13, %s20
    %p48 = scmp.eq.s32.totalorder %s47, 0
    %s50 = sadd.s32 %s49, 1
    %s51 = scalar_select %p48, %s49, %s50
    %p54 = pneg %p48
    %p55 = scmp.eq.s32.totalorder %s13, 1
    %p56 = por %p54, %p55
    %p57 = scmp.ne.s32.totalorder %s49, %s52
    %p58 = scmp.eq.s32.totalorder %s13, 0
    %p59 = por %p57, %p58
    %p60 = scmp.ne.s32.totalorder %s49, %s52
    %p61 = scmp.eq.s32.totalorder %s18, 1
    %p62 = por %p60, %p61
    %p63 = scmp.ne.s32.totalorder %s52, %s53
    %p64 = scmp.eq.s32.totalorder %s18, 0
    %p65 = por %p63, %p64
    %p66 = scmp.ne.s32.totalorder %s52, %s53
    %p67 = scmp.eq.s32.totalorder %s19, 1
    %p68 = por %p66, %p67
    %p70 = scmp.ne.s32.totalorder %s53, %s69
    %p71 = scmp.eq.s32.totalorder %s19, 0
    %p72 = por %p70, %p71
    %s73 = ssub.s32 %s13, %s20
    %p74 = scmp.eq.s32.totalorder %s73, 0
    %s76 = sadd.s32 %s75, 1
    %s77 = scalar_select %p74, %s75, %s76
    %p80 = pneg %p74
    %p81 = scmp.eq.s32.totalorder %s13, 1
    %p82 = por %p80, %p81
    %p83 = scmp.ne.s32.totalorder %s75, %s78
    %p84 = scmp.eq.s32.totalorder %s13, 0
    %p85 = por %p83, %p84
    %p86 = scmp.ne.s32.totalorder %s75, %s78
    %p87 = scmp.eq.s32.totalorder %s18, 1
    %p88 = por %p86, %p87
    %p89 = scmp.ne.s32.totalorder %s78, %s79
    %p90 = scmp.eq.s32.totalorder %s18, 0
    %p91 = por %p89, %p90
    %p92 = scmp.ne.s32.totalorder %s78, %s79
    %p93 = scmp.eq.s32.totalorder %s19, 1
    %p94 = por %p92, %p93
    %p96 = scmp.ne.s32.totalorder %s79, %s95
    %p97 = scmp.eq.s32.totalorder %s19, 0
    %p98 = por %p96, %p97
    %s100 = sadd.s32 %s99, 1
    %p103 = scmp.eq.s32.totalorder %s13, 1
    %p104 = scmp.ne.s32.totalorder %s99, %s101
    %p105 = scmp.eq.s32.totalorder %s13, 0
    %p106 = por %p104, %p105
    %p107 = scmp.ne.s32.totalorder %s99, %s101
    %p108 = scmp.eq.s32.totalorder %s18, 1
    %p109 = por %p107, %p108
    %p110 = scmp.ne.s32.totalorder %s101, %s102
    %p111 = scmp.eq.s32.totalorder %s18, 0
    %p112 = por %p110, %p111
    %p113 = scmp.ne.s32.totalorder %s101, %s102
    %p114 = scmp.eq.s32.totalorder %s19, 1
    %p115 = por %p113, %p114
    %p117 = scmp.ne.s32.totalorder %s102, %s116
    %p118 = scmp.eq.s32.totalorder %s19, 0
    %p119 = por %p117, %p118
    %s121 = sadd.s32 %s120, 1
    %p124 = scmp.eq.s32.totalorder %s13, 1
    %p125 = scmp.ne.s32.totalorder %s120, %s122
    %p126 = scmp.eq.s32.totalorder %s13, 0
    %p127 = por %p125, %p126
    %p128 = scmp.ne.s32.totalorder %s120, %s122
    %p129 = scmp.eq.s32.totalorder %s18, 1
    %p130 = por %p128, %p129
    %p131 = scmp.ne.s32.totalorder %s122, %s123
    %p132 = scmp.eq.s32.totalorder %s18, 0
    %p133 = por %p131, %p132
    %p134 = scmp.ne.s32.totalorder %s122, %s123
    %p135 = scmp.eq.s32.totalorder %s19, 1
    %p136 = por %p134, %p135
    %p138 = scmp.ne.s32.totalorder %s123, %s137
    %p139 = scmp.eq.s32.totalorder %s19, 0
    %p140 = por %p138, %p139
    %s142 = sadd.s32 %s141, 1
    %p145 = scmp.eq.s32.totalorder %s13, 1
    %p146 = scmp.ne.s32.totalorder %s141, %s143
    %p147 = scmp.eq.s32.totalorder %s13, 0
    %p148 = por %p146, %p147
    %p149 = scmp.ne.s32.totalorder %s141, %s143
    %p150 = scmp.eq.s32.totalorder %s18, 1
    %p151 = por %p149, %p150
    %p152 = scmp.ne.s32.totalorder %s143, %s144
    %p153 = scmp.eq.s32.totalorder %s18, 0
    %p154 = por %p152, %p153
    %p155 = scmp.ne.s32.totalorder %s143, %s144
    %p156 = scmp.eq.s32.totalorder %s19, 1
    %p157 = por %p155, %p156
    %p159 = scmp.ne.s32.totalorder %s144, %s158
    %p160 = scmp.eq.s32.totalorder %s19, 0
    %p161 = por %p159, %p160
    %s163 = sadd.s32 %s162, 1
    %p166 = scmp.eq.s32.totalorder %s13, 1
    %p167 = scmp.ne.s32.totalorder %s162, %s164
    %p168 = scmp.eq.s32.totalorder %s13, 0
    %p169 = por %p167, %p168
    %p170 = scmp.ne.s32.totalorder %s162, %s164
    %p171 = scmp.eq.s32.totalorder %s18, 1
    %p172 = por %p170, %p171
    %p173 = scmp.ne.s32.totalorder %s164, %s165
    %p174 = scmp.eq.s32.totalorder %s18, 0
    %p175 = por %p173, %p174
    %p176 = scmp.ne.s32.totalorder %s164, %s165
    %p177 = scmp.eq.s32.totalorder %s19, 1
    %p178 = por %p176, %p177
    %p180 = scmp.ne.s32.totalorder %s165, %s179
    %p181 = scmp.eq.s32.totalorder %s19, 0
    %p182 = por %p180, %p181
    %s183 = ssub.s32 %s13, %s20
    %p184 = scmp.eq.s32.totalorder %s183, 0
    %s186 = sadd.s32 %s185, 1
    %s187 = scalar_select %p184, %s185, %s186
    %p190 = pneg %p184
    %p191 = scmp.eq.s32.totalorder %s13, 1
    %p192 = por %p190, %p191
    %p193 = scmp.ne.s32.totalorder %s185, %s188
    %p194 = scmp.eq.s32.totalorder %s13, 0
    %p195 = por %p193, %p194
    %p196 = scmp.ne.s32.totalorder %s185, %s188
    %p197 = scmp.eq.s32.totalorder %s18, 1
    %p198 = por %p196, %p197
    %p199 = scmp.ne.s32.totalorder %s188, %s189
    %p200 = scmp.eq.s32.totalorder %s18, 0
    %p201 = por %p199, %p200
    %p202 = scmp.ne.s32.totalorder %s188, %s189
    %p203 = scmp.eq.s32.totalorder %s19, 1
    %p204 = por %p202, %p203
    %p206 = scmp.ne.s32.totalorder %s189, %s205
    %p207 = scmp.eq.s32.totalorder %s19, 0
    %p208 = por %p206, %p207
    %p209 = scmp.le.s32.totalorder 1, %s13
    %p210 = scmp.lt.s32.totalorder %s13, 3
    %p211 = pnand %p209, %p210
    %p212 = pneg %p211
    // Predicated region
    $region9: #{pretrained_bert_forward.10} parent=5 // pred_check
      _
    $region10: #{pretrained_bert_forward.10} parent=5 // pred_check_branch
      %214 = sbr.rel (%p211) target = $region12
    $region11: #{pretrained_bert_forward.10} parent=5 // pred_region
      %s215 = ssub.s32 %s13, 1
      // Predicated region
      $region13: #{pretrained_bert_forward.10} parent=11 // pred_check
        %p216 = pneg %p112
      $region14: #{pretrained_bert_forward.10} parent=11 // pred_check_branch
        %218 = sbr.rel (%p216) target = $region16
      $region15: #{pretrained_bert_forward.10} parent=11 // pred_region
        _
      $region16: #{pretrained_bert_forward.10} parent=11 // pred_fallthru
        _
      // Predicated region
      $region17: #{pretrained_bert_forward.10} parent=11 // pred_check
        %p219 = pneg %p133
      $region18: #{pretrained_bert_forward.10} parent=11 // pred_check_branch
        %221 = sbr.rel (%p219) target = $region20
      $region19: #{pretrained_bert_forward.10} parent=11 // pred_region
        _
      $region20: #{pretrained_bert_forward.10} parent=11 // pred_fallthru
        _
      // Predicated region
      $region21: #{pretrained_bert_forward.10} parent=11 // pred_check
        %p222 = pneg %p154
      $region22: #{pretrained_bert_forward.10} parent=11 // pred_check_branch
        %224 = sbr.rel (%p222) target = $region24
      $region23: #{pretrained_bert_forward.10} parent=11 // pred_region
        _
      $region24: #{pretrained_bert_forward.10} parent=11 // pred_fallthru
        _
      // Predicated region
      $region25: #{pretrained_bert_forward.10} parent=11 // pred_check
        %p225 = pneg %p175
      $region26: #{pretrained_bert_forward.10} parent=11 // pred_check_branch
        %227 = sbr.rel (%p225) target = $region28
      $region27: #{pretrained_bert_forward.10} parent=11 // pred_region
        _
      $region28: #{pretrained_bert_forward.10} parent=11 // pred_fallthru
        _
    $region12: #{pretrained_bert_forward.10} parent=5 // pred_fallthru
      _
    %p228 = scmp.lt.s32.totalorder %s13, 2
    // Predicated region
    $region29: #{pretrained_bert_forward.10} parent=5 // pred_check
      %p229 = pneg %p228
    $region30: #{pretrained_bert_forward.10} parent=5 // pred_check_branch
      %231 = sbr.rel (%p229) target = $region32
    $region31: #{pretrained_bert_forward.10} parent=5 // pred_region
      // Predicated region
      $region33: #{pretrained_bert_forward.10} parent=31 // pred_check
        %p232 = pneg %p33
      $region34: #{pretrained_bert_forward.10} parent=31 // pred_check_branch
        %234 = sbr.rel (%p232) target = $region36
      $region35: #{pretrained_bert_forward.10} parent=31 // pred_region
        %p235 = scmp.lt.s32.totalorder %s13, 1
        %s236 = scalar_select %p235, %s13, 1
        %s237 = smul.addr %s236, 4
        %s238 = scalar_lea.vmem %s0, %s237
      $region36: #{pretrained_bert_forward.10} parent=31 // pred_fallthru
        _
      // Predicated region
      $region37: #{pretrained_bert_forward.10} parent=31 // pred_check
        %p239 = pneg %p59
      $region38: #{pretrained_bert_forward.10} parent=31 // pred_check_branch
        %241 = sbr.rel (%p239) target = $region40
      $region39: #{pretrained_bert_forward.10} parent=31 // pred_region
        %p242 = scmp.lt.s32.totalorder %s13, 1
        %s243 = scalar_select %p242, %s13, 1
        %s244 = scalar_lea.vmem %s1, %s243
      $region40: #{pretrained_bert_forward.10} parent=31 // pred_fallthru
        _
      // Predicated region
      $region41: #{pretrained_bert_forward.10} parent=31 // pred_check
        %p245 = pneg %p85
      $region42: #{pretrained_bert_forward.10} parent=31 // pred_check_branch
        %247 = sbr.rel (%p245) target = $region44
      $region43: #{pretrained_bert_forward.10} parent=31 // pred_region
        %p248 = scmp.lt.s32.totalorder %s13, 1
        %s249 = scalar_select %p248, %s13, 1
        %s250 = smul.addr %s249, 4
        %s251 = scalar_lea.vmem %s2, %s250
      $region44: #{pretrained_bert_forward.10} parent=31 // pred_fallthru
        _
    $region32: #{pretrained_bert_forward.10} parent=5 // pred_fallthru
      _
    %p252 = scmp.le.s32.totalorder 1, %s13
    %p253 = scmp.lt.s32.totalorder %s13, 3
    %p254 = pnand %p252, %p253
    %p255 = pneg %p254
    // Predicated region
    $region45: #{pretrained_bert_forward.10} parent=5 // pred_check
      _
    $region46: #{pretrained_bert_forward.10} parent=5 // pred_check_branch
      %257 = sbr.rel (%p254) target = $region48
    $region47: #{pretrained_bert_forward.10} parent=5 // pred_region
      %s258 = ssub.s32 %s13, 1
      %p259 = scmp.lt.s32.totalorder %s18, 1
      %s260 = scalar_select %p259, %s18, 1
      %s261 = smul.addr %s260, 4
      %s262 = scalar_lea.vmem %s0, %s261
      %p263 = pneg %p39
      %p264 = pneg %p36
      %p265 = scmp.lt.s32.totalorder %s18, 1
      %s266 = scalar_select %p265, %s18, 1
      %s267 = scalar_lea.vmem %s1, %s266
      %p268 = pneg %p65
      %p269 = pneg %p62
      %p270 = scmp.lt.s32.totalorder %s18, 1
      %s271 = scalar_select %p270, %s18, 1
      %s272 = smul.addr %s271, 4
      %s273 = scalar_lea.vmem %s2, %s272
      %p274 = pneg %p91
      %p275 = pneg %p88
      %p276 = pneg %p112
      %p277 = pneg %p109
      %p278 = pneg %p133
      %p279 = pneg %p130
      %p280 = pneg %p154
      %p281 = pneg %p151
      %p282 = pneg %p175
      %p283 = pneg %p172
      %p284 = pneg %p201
      %p285 = pneg %p198
      %p286 = scmp.lt.s32.totalorder %s18, 1
      %s287 = scalar_select %p286, %s18, 1
      %s288 = smul.addr %s287, 4
      %s289 = scalar_lea.vmem %s7, %s288
      %p290 = scmp.lt.s32.totalorder %s18, 1
      %s291 = scalar_select %p290, %s18, 1
      %s292 = smul.addr %s291, 4
      %s293 = scalar_lea.vmem %s0, %s292
      %p294 = scmp.lt.s32.totalorder %s18, 1
      %s295 = scalar_select %p294, %s18, 1
      %s296 = scalar_lea.vmem %s1, %s295
      %p297 = scmp.lt.s32.totalorder %s18, 1
      %s298 = scalar_select %p297, %s18, 1
      %s299 = smul.addr %s298, 4
      %s300 = scalar_lea.vmem %s2, %s299
      %p301 = scmp.lt.s32.totalorder %s18, 1
      %s302 = scalar_select %p301, %s18, 1
      %s303 = smul.addr %s302, 4
      %s304 = scalar_lea.vmem %s7, %s303
      %v306 = vld [vmem:[%s293] sm:$0xf]
      %v307 = vunpack.c.l.bf16 %v306
      %v308 = vld [vmem:[%s296] sm:$0x1]
      %310 = vrot.lane.b32.xlu0 %v307, 96
      %v311 = vpop.permute.xlu0 %310
      %vm312 = vcmask 64512
      %v313 = vsel %vm312, %v307, 0
      %v315 = vsel %vm312, %v311, 0
      %317 = vmatprep.subr.mxu0 0.0
      %318 = vmatpush1.xpose.msra.mxu0 %v315
      %319 = vmatprep.subr.mxu0 0.0
      %320 = vmatpush1.xpose.msra.mxu0 0.0
      %321 = vmatprep.subr.mxu0 0.0
      %322 = vmatpush1.xpose.msra.mxu0 0.0
      %323 = vmatprep.subr.mxu0 0.0
      %324 = vmatpush1.xpose.msra.mxu0 0.0
      %325 = vmatprep.subr.mxu0 0.0
      %326 = vmatpush1.xpose.msra.mxu0 0.0
      %327 = vmatprep.subr.mxu0 0.0
      %328 = vmatpush1.xpose.msra.mxu0 0.0
      %329 = vmatprep.subr.mxu0 0.0
      %330 = vmatpush1.xpose.msra.mxu0 0.0
      %331 = vmatprep.subr.mxu0 0.0
      %332 = vmatpush1.xpose.msra.mxu0 0.0
      %333 = vmatprep.subr.mxu0 0.0
      %334 = vmatpush1.xpose.msra.mxu0 0.0
      %335 = vmatprep.subr.mxu0 0.0
      %336 = vmatpush1.xpose.msra.mxu0 0.0
      %337 = vmatprep.subr.mxu0 0.0
      %338 = vmatpush1.xpose.msra.mxu0 0.0
      %339 = vmatprep.subr.mxu0 0.0
      %340 = vmatpush1.xpose.msra.mxu0 0.0
      %341 = vmatprep.subr.mxu0 0.0
      %342 = vmatpush1.xpose.msra.mxu0 0.0
      %343 = vmatprep.subr.mxu0 0.0
      %344 = vmatpush1.xpose.msra.mxu0 0.0
      %345 = vmatprep.subr.mxu0 0.0
      %346 = vmatpush1.xpose.msra.mxu0 0.0
      %347 = vmatprep.subr.mxu0 0.0
      %348 = vmatpush1.xpose.msra.mxu0 0.0
      %349 = vmatprep.subr.mxu0 0.0
      %350 = vmatpush1.xpose.msra.mxu0 0.0
      %351 = vmatprep.subr.mxu0 0.0
      %352 = vmatpush1.xpose.msra.mxu0 0.0
      %353 = vmatprep.subr.mxu0 0.0
      %354 = vmatpush1.xpose.msra.mxu0 0.0
      %355 = vmatprep.subr.mxu0 0.0
      %356 = vmatpush1.xpose.msra.mxu0 0.0
      %357 = vmatprep.subr.mxu0 0.0
      %358 = vmatpush1.xpose.msra.mxu0 0.0
      %359 = vmatprep.subr.mxu0 0.0
      %360 = vmatpush1.xpose.msra.mxu0 0.0
      %361 = vmatprep.subr.mxu0 0.0
      %362 = vmatpush1.xpose.msra.mxu0 0.0
      %363 = vmatprep.subr.mxu0 0.0
      %364 = vmatpush1.xpose.msra.mxu0 0.0
      %365 = vmatprep.subr.mxu0 0.0
      %366 = vmatpush1.xpose.msra.mxu0 0.0
      %367 = vmatprep.subr.mxu0 0.0
      %368 = vmatpush1.xpose.msra.mxu0 0.0
      %369 = vmatprep.subr.mxu0 0.0
      %370 = vmatpush1.xpose.msra.mxu0 0.0
      %371 = vmatprep.subr.mxu0 0.0
      %372 = vmatpush1.xpose.msra.mxu0 0.0
      %373 = vmatprep.subr.mxu0 0.0
      %374 = vmatpush1.xpose.msra.mxu0 0.0
      %375 = vmatprep.subr.mxu0 0.0
      %376 = vmatpush1.xpose.msra.mxu0 0.0
      %377 = vmatprep.subr.mxu0 0.0
      %378 = vmatpush1.xpose.msra.mxu0 0.0
      %379 = vmatprep.subr.mxu0 0.0
      %380 = vmatpush1.xpose.msra.mxu0 0.0
      %381 = vmatprep.mubr.f32.mxu0 0.0
      %382 = vmatmul.mubr.f32.gmra.mrb[0].mxu0 %v313
      %v383 = vpop.f32.mrb[0].mxu0
      %v384 = vadd.f32 0.0, %v383
      %v385 = vpop.f32.mrb[0].mxu0
      %386 = vdwg.mxu0
      %v387 = vmul.f32 %v384, 0.35355338
      %v389 = vlaneseq
      %v390 = vshrl.u32 %v389, 7
      %v391 = vsub.s32 0, %v390
      %v392 = vrot.slane %v308, %v391
      %v394 = vadd.f32 %v387, %v392
      %v395 = vsel %vm312, %v394, -inf
      %396 = vmax.xlane.f32.xlu0 %v395
      %v397 = vpop.xlane.xlu0 %396
      %v398 = vsub.f32 %v394, %v397
      %v399 = vmul.f32 %v398, 1.442695
      %v400 = vpow.pop %v399
      %v401 = vsel %vm312, %v400, 0.0
      %402 = vadd.xlane.f32.xlu0 %v401
      %v403 = vpop.xlane.xlu0 %402
      %v404 = vrcp.pop %v403
      %v405 = vmul.f32 %v400, %v404
      %406 = vrot.lane.b32.xlu0 %v307, 64
      %v407 = vpop.permute.xlu0 %406
      %v410 = vsel %vm312, %v405, 0
      %412 = vmatprep.subr.mxu0 0.0
      %413 = vmatpush1.msra.mxu0 %v407
      %414 = vmatprep.subr.mxu0 0.0
      %415 = vmatpush1.msra.mxu0 0.0
      %416 = vmatprep.subr.mxu0 0.0
      %417 = vmatpush1.msra.mxu0 0.0
      %418 = vmatprep.subr.mxu0 0.0
      %419 = vmatpush1.msra.mxu0 0.0
      %420 = vmatprep.subr.mxu0 0.0
      %421 = vmatpush1.msra.mxu0 0.0
      %422 = vmatprep.subr.mxu0 0.0
      %423 = vmatpush1.msra.mxu0 0.0
      %424 = vmatprep.subr.mxu0 0.0
      %425 = vmatpush1.msra.mxu0 0.0
      %426 = vmatprep.subr.mxu0 0.0
      %427 = vmatpush1.msra.mxu0 0.0
      %428 = vmatprep.subr.mxu0 0.0
      %429 = vmatpush1.msra.mxu0 0.0
      %430 = vmatprep.subr.mxu0 0.0
      %431 = vmatpush1.msra.mxu0 0.0
      %432 = vmatprep.subr.mxu0 0.0
      %433 = vmatpush1.msra.mxu0 0.0
      %434 = vmatprep.subr.mxu0 0.0
      %435 = vmatpush1.msra.mxu0 0.0
      %436 = vmatprep.subr.mxu0 0.0
      %437 = vmatpush1.msra.mxu0 0.0
      %438 = vmatprep.subr.mxu0 0.0
      %439 = vmatpush1.msra.mxu0 0.0
      %440 = vmatprep.subr.mxu0 0.0
      %441 = vmatpush1.msra.mxu0 0.0
      %442 = vmatprep.subr.mxu0 0.0
      %443 = vmatpush1.msra.mxu0 0.0
      %444 = vmatprep.subr.mxu0 0.0
      %445 = vmatpush1.msra.mxu0 0.0
      %446 = vmatprep.subr.mxu0 0.0
      %447 = vmatpush1.msra.mxu0 0.0
      %448 = vmatprep.subr.mxu0 0.0
      %449 = vmatpush1.msra.mxu0 0.0
      %450 = vmatprep.subr.mxu0 0.0
      %451 = vmatpush1.msra.mxu0 0.0
      %452 = vmatprep.subr.mxu0 0.0
      %453 = vmatpush1.msra.mxu0 0.0
      %454 = vmatprep.subr.mxu0 0.0
      %455 = vmatpush1.msra.mxu0 0.0
      %456 = vmatprep.subr.mxu0 0.0
      %457 = vmatpush1.msra.mxu0 0.0
      %458 = vmatprep.subr.mxu0 0.0
      %459 = vmatpush1.msra.mxu0 0.0
      %460 = vmatprep.subr.mxu0 0.0
      %461 = vmatpush1.msra.mxu0 0.0
      %462 = vmatprep.subr.mxu0 0.0
      %463 = vmatpush1.msra.mxu0 0.0
      %464 = vmatprep.subr.mxu0 0.0
      %465 = vmatpush1.msra.mxu0 0.0
      %466 = vmatprep.subr.mxu0 0.0
      %467 = vmatpush1.msra.mxu0 0.0
      %468 = vmatprep.subr.mxu0 0.0
      %469 = vmatpush1.msra.mxu0 0.0
      %470 = vmatprep.subr.mxu0 0.0
      %471 = vmatpush1.msra.mxu0 0.0
      %472 = vmatprep.subr.mxu0 0.0
      %473 = vmatpush1.msra.mxu0 0.0
      %474 = vmatprep.subr.mxu0 0.0
      %475 = vmatpush1.msra.mxu0 0.0
      %476 = vmatprep.mubr.f32.mxu0 0.0
      %477 = vmatmul.mubr.f32.gmra.mrb[0].mxu0 %v410
      %v478 = vpop.f32.mrb[0].mxu0
      %v479 = vadd.f32 0.0, %v478
      %v480 = vpop.f32.mrb[0].mxu0
      %481 = vdwg.mxu0
      %482 = vrot.lane.b32.xlu0 %v307, 120
      %v483 = vpop.permute.xlu0 %482
      %484 = vrot.lane.b32.xlu0 %v307, 88
      %v485 = vpop.permute.xlu0 %484
      %v486 = vsel %vm312, %v483, 0
      %v488 = vsel %vm312, %v485, 0
      %490 = vmatprep.subr.mxu0 0.0
      %491 = vmatpush1.xpose.msra.mxu0 %v488
      %492 = vmatprep.subr.mxu0 0.0
      %493 = vmatpush1.xpose.msra.mxu0 0.0
      %494 = vmatprep.subr.mxu0 0.0
      %495 = vmatpush1.xpose.msra.mxu0 0.0
      %496 = vmatprep.subr.mxu0 0.0
      %497 = vmatpush1.xpose.msra.mxu0 0.0
      %498 = vmatprep.subr.mxu0 0.0
      %499 = vmatpush1.xpose.msra.mxu0 0.0
      %500 = vmatprep.subr.mxu0 0.0
      %501 = vmatpush1.xpose.msra.mxu0 0.0
      %502 = vmatprep.subr.mxu0 0.0
      %503 = vmatpush1.xpose.msra.mxu0 0.0
      %504 = vmatprep.subr.mxu0 0.0
      %505 = vmatpush1.xpose.msra.mxu0 0.0
      %506 = vmatprep.subr.mxu0 0.0
      %507 = vmatpush1.xpose.msra.mxu0 0.0
      %508 = vmatprep.subr.mxu0 0.0
      %509 = vmatpush1.xpose.msra.mxu0 0.0
      %510 = vmatprep.subr.mxu0 0.0
      %511 = vmatpush1.xpose.msra.mxu0 0.0
      %512 = vmatprep.subr.mxu0 0.0
      %513 = vmatpush1.xpose.msra.mxu0 0.0
      %514 = vmatprep.subr.mxu0 0.0
      %515 = vmatpush1.xpose.msra.mxu0 0.0
      %516 = vmatprep.subr.mxu0 0.0
      %517 = vmatpush1.xpose.msra.mxu0 0.0
      %518 = vmatprep.subr.mxu0 0.0
      %519 = vmatpush1.xpose.msra.mxu0 0.0
      %520 = vmatprep.subr.mxu0 0.0
      %521 = vmatpush1.xpose.msra.mxu0 0.0
      %522 = vmatprep.subr.mxu0 0.0
      %523 = vmatpush1.xpose.msra.mxu0 0.0
      %524 = vmatprep.subr.mxu0 0.0
      %525 = vmatpush1.xpose.msra.mxu0 0.0
      %526 = vmatprep.subr.mxu0 0.0
      %527 = vmatpush1.xpose.msra.mxu0 0.0
      %528 = vmatprep.subr.mxu0 0.0
      %529 = vmatpush1.xpose.msra.mxu0 0.0
      %530 = vmatprep.subr.mxu0 0.0
      %531 = vmatpush1.xpose.msra.mxu0 0.0
      %532 = vmatprep.subr.mxu0 0.0
      %533 = vmatpush1.xpose.msra.mxu0 0.0
      %534 = vmatprep.subr.mxu0 0.0
      %535 = vmatpush1.xpose.msra.mxu0 0.0
      %536 = vmatprep.subr.mxu0 0.0
      %537 = vmatpush1.xpose.msra.mxu0 0.0
      %538 = vmatprep.subr.mxu0 0.0
      %539 = vmatpush1.xpose.msra.mxu0 0.0
      %540 = vmatprep.subr.mxu0 0.0
      %541 = vmatpush1.xpose.msra.mxu0 0.0
      %542 = vmatprep.subr.mxu0 0.0
      %543 = vmatpush1.xpose.msra.mxu0 0.0
      %544 = vmatprep.subr.mxu0 0.0
      %545 = vmatpush1.xpose.msra.mxu0 0.0
      %546 = vmatprep.subr.mxu0 0.0
      %547 = vmatpush1.xpose.msra.mxu0 0.0
      %548 = vmatprep.subr.mxu0 0.0
      %549 = vmatpush1.xpose.msra.mxu0 0.0
      %550 = vmatprep.subr.mxu0 0.0
      %551 = vmatpush1.xpose.msra.mxu0 0.0
      %552 = vmatprep.subr.mxu0 0.0
      %553 = vmatpush1.xpose.msra.mxu0 0.0
      %554 = vmatprep.mubr.f32.mxu0 0.0
      %555 = vmatmul.mubr.f32.gmra.mrb[0].mxu0 %v486
      %v556 = vpop.f32.mrb[0].mxu0
      %v557 = vadd.f32 0.0, %v556
      %v558 = vpop.f32.mrb[0].mxu0
      %559 = vdwg.mxu0
      %v560 = vmul.f32 %v557, 0.35355338
      %v561 = vadd.f32 %v560, %v392
      %v562 = vsel %vm312, %v561, -inf
      %563 = vmax.xlane.f32.xlu0 %v562
      %v564 = vpop.xlane.xlu0 %563
      %v565 = vsub.f32 %v561, %v564
      %v566 = vmul.f32 %v565, 1.442695
      %v567 = vpow.pop %v566
      %v568 = vsel %vm312, %v567, 0.0
      %569 = vadd.xlane.f32.xlu0 %v568
      %v570 = vpop.xlane.xlu0 %569
      %v571 = vrcp.pop %v570
      %v572 = vmul.f32 %v567, %v571
      %573 = vrot.lane.b32.xlu0 %v307, 56
      %v574 = vpop.permute.xlu0 %573
      %v577 = vsel %vm312, %v572, 0
      %579 = vmatprep.subr.mxu0 0.0
      %580 = vmatpush1.msra.mxu0 %v574
      %581 = vmatprep.subr.mxu0 0.0
      %582 = vmatpush1.msra.mxu0 0.0
      %583 = vmatprep.subr.mxu0 0.0
      %584 = vmatpush1.msra.mxu0 0.0
      %585 = vmatprep.subr.mxu0 0.0
      %586 = vmatpush1.msra.mxu0 0.0
      %587 = vmatprep.subr.mxu0 0.0
      %588 = vmatpush1.msra.mxu0 0.0
      %589 = vmatprep.subr.mxu0 0.0
      %590 = vmatpush1.msra.mxu0 0.0
      %591 = vmatprep.subr.mxu0 0.0
      %592 = vmatpush1.msra.mxu0 0.0
      %593 = vmatprep.subr.mxu0 0.0
      %594 = vmatpush1.msra.mxu0 0.0
      %595 = vmatprep.subr.mxu0 0.0
      %596 = vmatpush1.msra.mxu0 0.0
      %597 = vmatprep.subr.mxu0 0.0
      %598 = vmatpush1.msra.mxu0 0.0
      %599 = vmatprep.subr.mxu0 0.0
      %600 = vmatpush1.msra.mxu0 0.0
      %601 = vmatprep.subr.mxu0 0.0
      %602 = vmatpush1.msra.mxu0 0.0
      %603 = vmatprep.subr.mxu0 0.0
      %604 = vmatpush1.msra.mxu0 0.0
      %605 = vmatprep.subr.mxu0 0.0
      %606 = vmatpush1.msra.mxu0 0.0
      %607 = vmatprep.subr.mxu0 0.0
      %608 = vmatpush1.msra.mxu0 0.0
      %609 = vmatprep.subr.mxu0 0.0
      %610 = vmatpush1.msra.mxu0 0.0
      %611 = vmatprep.subr.mxu0 0.0
      %612 = vmatpush1.msra.mxu0 0.0
      %613 = vmatprep.subr.mxu0 0.0
      %614 = vmatpush1.msra.mxu0 0.0
      %615 = vmatprep.subr.mxu0 0.0
      %616 = vmatpush1.msra.mxu0 0.0
      %617 = vmatprep.subr.mxu0 0.0
      %618 = vmatpush1.msra.mxu0 0.0
      %619 = vmatprep.subr.mxu0 0.0
      %620 = vmatpush1.msra.mxu0 0.0
      %621 = vmatprep.subr.mxu0 0.0
      %622 = vmatpush1.msra.mxu0 0.0
      %623 = vmatprep.subr.mxu0 0.0
      %624 = vmatpush1.msra.mxu0 0.0
      %625 = vmatprep.subr.mxu0 0.0
      %626 = vmatpush1.msra.mxu0 0.0
      %627 = vmatprep.subr.mxu0 0.0
      %628 = vmatpush1.msra.mxu0 0.0
      %629 = vmatprep.subr.mxu0 0.0
      %630 = vmatpush1.msra.mxu0 0.0
      %631 = vmatprep.subr.mxu0 0.0
      %632 = vmatpush1.msra.mxu0 0.0
      %633 = vmatprep.subr.mxu0 0.0
      %634 = vmatpush1.msra.mxu0 0.0
      %635 = vmatprep.subr.mxu0 0.0
      %636 = vmatpush1.msra.mxu0 0.0
      %637 = vmatprep.subr.mxu0 0.0
      %638 = vmatpush1.msra.mxu0 0.0
      %639 = vmatprep.subr.mxu0 0.0
      %640 = vmatpush1.msra.mxu0 0.0
      %641 = vmatprep.subr.mxu0 0.0
      %642 = vmatpush1.msra.mxu0 0.0
      %643 = vmatprep.mubr.f32.mxu0 0.0
      %644 = vmatmul.mubr.f32.gmra.mrb[0].mxu0 %v577
      %v645 = vpop.f32.mrb[0].mxu0
      %v646 = vadd.f32 0.0, %v645
      %v647 = vpop.f32.mrb[0].mxu0
      %648 = vdwg.mxu0
      %649 = vrot.lane.b32.xlu0 %v307, 112
      %v650 = vpop.permute.xlu0 %649
      %651 = vrot.lane.b32.xlu0 %v307, 80
      %v652 = vpop.permute.xlu0 %651
      %v653 = vsel %vm312, %v650, 0
      %v655 = vsel %vm312, %v652, 0
      %657 = vmatprep.subr.mxu0 0.0
      %658 = vmatpush1.xpose.msra.mxu0 %v655
      %659 = vmatprep.subr.mxu0 0.0
      %660 = vmatpush1.xpose.msra.mxu0 0.0
      %661 = vmatprep.subr.mxu0 0.0
      %662 = vmatpush1.xpose.msra.mxu0 0.0
      %663 = vmatprep.subr.mxu0 0.0
      %664 = vmatpush1.xpose.msra.mxu0 0.0
      %665 = vmatprep.subr.mxu0 0.0
      %666 = vmatpush1.xpose.msra.mxu0 0.0
      %667 = vmatprep.subr.mxu0 0.0
      %668 = vmatpush1.xpose.msra.mxu0 0.0
      %669 = vmatprep.subr.mxu0 0.0
      %670 = vmatpush1.xpose.msra.mxu0 0.0
      %671 = vmatprep.subr.mxu0 0.0
      %672 = vmatpush1.xpose.msra.mxu0 0.0
      %673 = vmatprep.subr.mxu0 0.0
      %674 = vmatpush1.xpose.msra.mxu0 0.0
      %675 = vmatprep.subr.mxu0 0.0
      %676 = vmatpush1.xpose.msra.mxu0 0.0
      %677 = vmatprep.subr.mxu0 0.0
      %678 = vmatpush1.xpose.msra.mxu0 0.0
      %679 = vmatprep.subr.mxu0 0.0
      %680 = vmatpush1.xpose.msra.mxu0 0.0
      %681 = vmatprep.subr.mxu0 0.0
      %682 = vmatpush1.xpose.msra.mxu0 0.0
      %683 = vmatprep.subr.mxu0 0.0
      %684 = vmatpush1.xpose.msra.mxu0 0.0
      %685 = vmatprep.subr.mxu0 0.0
      %686 = vmatpush1.xpose.msra.mxu0 0.0
      %687 = vmatprep.subr.mxu0 0.0
      %688 = vmatpush1.xpose.msra.mxu0 0.0
      %689 = vmatprep.subr.mxu0 0.0
      %690 = vmatpush1.xpose.msra.mxu0 0.0
      %691 = vmatprep.subr.mxu0 0.0
      %692 = vmatpush1.xpose.msra.mxu0 0.0
      %693 = vmatprep.subr.mxu0 0.0
      %694 = vmatpush1.xpose.msra.mxu0 0.0
      %695 = vmatprep.subr.mxu0 0.0
      %696 = vmatpush1.xpose.msra.mxu0 0.0
      %697 = vmatprep.subr.mxu0 0.0
      %698 = vmatpush1.xpose.msra.mxu0 0.0
      %699 = vmatprep.subr.mxu0 0.0
      %700 = vmatpush1.xpose.msra.mxu0 0.0
      %701 = vmatprep.subr.mxu0 0.0
      %702 = vmatpush1.xpose.msra.mxu0 0.0
      %703 = vmatprep.subr.mxu0 0.0
      %704 = vmatpush1.xpose.msra.mxu0 0.0
      %705 = vmatprep.subr.mxu0 0.0
      %706 = vmatpush1.xpose.msra.mxu0 0.0
      %707 = vmatprep.subr.mxu0 0.0
      %708 = vmatpush1.xpose.msra.mxu0 0.0
      %709 = vmatprep.subr.mxu0 0.0
      %710 = vmatpush1.xpose.msra.mxu0 0.0
      %711 = vmatprep.subr.mxu0 0.0
      %712 = vmatpush1.xpose.msra.mxu0 0.0
      %713 = vmatprep.subr.mxu0 0.0
      %714 = vmatpush1.xpose.msra.mxu0 0.0
      %715 = vmatprep.subr.mxu0 0.0
      %716 = vmatpush1.xpose.msra.mxu0 0.0
      %717 = vmatprep.subr.mxu0 0.0
      %718 = vmatpush1.xpose.msra.mxu0 0.0
      %719 = vmatprep.subr.mxu0 0.0
      %720 = vmatpush1.xpose.msra.mxu0 0.0
      %721 = vmatprep.mubr.f32.mxu0 0.0
      %722 = vmatmul.mubr.f32.gmra.mrb[0].mxu0 %v653
      %v723 = vpop.f32.mrb[0].mxu0
      %v724 = vadd.f32 0.0, %v723
      %v725 = vpop.f32.mrb[0].mxu0
      %726 = vdwg.mxu0
      %v727 = vmul.f32 %v724, 0.35355338
      %v728 = vadd.f32 %v727, %v392
      %v729 = vsel %vm312, %v728, -inf
      %730 = vmax.xlane.f32.xlu0 %v729
      %v731 = vpop.xlane.xlu0 %730
      %v732 = vsub.f32 %v728, %v731
      %v733 = vmul.f32 %v732, 1.442695
      %v734 = vpow.pop %v733
      %v735 = vsel %vm312, %v734, 0.0
      %736 = vadd.xlane.f32.xlu0 %v735
      %v737 = vpop.xlane.xlu0 %736
      %v738 = vrcp.pop %v737
      %v739 = vmul.f32 %v734, %v738
      %740 = vrot.lane.b32.xlu0 %v307, 48
      %v741 = vpop.permute.xlu0 %740
      %v744 = vsel %vm312, %v739, 0
      %746 = vmatprep.subr.mxu0 0.0
      %747 = vmatpush1.msra.mxu0 %v741
      %748 = vmatprep.subr.mxu0 0.0
      %749 = vmatpush1.msra.mxu0 0.0
      %750 = vmatprep.subr.mxu0 0.0
      %751 = vmatpush1.msra.mxu0 0.0
      %752 = vmatprep.subr.mxu0 0.0
      %753 = vmatpush1.msra.mxu0 0.0
      %754 = vmatprep.subr.mxu0 0.0
      %755 = vmatpush1.msra.mxu0 0.0
      %756 = vmatprep.subr.mxu0 0.0
      %757 = vmatpush1.msra.mxu0 0.0
      %758 = vmatprep.subr.mxu0 0.0
      %759 = vmatpush1.msra.mxu0 0.0
      %760 = vmatprep.subr.mxu0 0.0
      %761 = vmatpush1.msra.mxu0 0.0
      %762 = vmatprep.subr.mxu0 0.0
      %763 = vmatpush1.msra.mxu0 0.0
      %764 = vmatprep.subr.mxu0 0.0
      %765 = vmatpush1.msra.mxu0 0.0
      %766 = vmatprep.subr.mxu0 0.0
      %767 = vmatpush1.msra.mxu0 0.0
      %768 = vmatprep.subr.mxu0 0.0
      %769 = vmatpush1.msra.mxu0 0.0
      %770 = vmatprep.subr.mxu0 0.0
      %771 = vmatpush1.msra.mxu0 0.0
      %772 = vmatprep.subr.mxu0 0.0
      %773 = vmatpush1.msra.mxu0 0.0
      %774 = vmatprep.subr.mxu0 0.0
      %775 = vmatpush1.msra.mxu0 0.0
      %776 = vmatprep.subr.mxu0 0.0
      %777 = vmatpush1.msra.mxu0 0.0
      %778 = vmatprep.subr.mxu0 0.0
      %779 = vmatpush1.msra.mxu0 0.0
      %780 = vmatprep.subr.mxu0 0.0
      %781 = vmatpush1.msra.mxu0 0.0
      %782 = vmatprep.subr.mxu0 0.0
      %783 = vmatpush1.msra.mxu0 0.0
      %784 = vmatprep.subr.mxu0 0.0
      %785 = vmatpush1.msra.mxu0 0.0
      %786 = vmatprep.subr.mxu0 0.0
      %787 = vmatpush1.msra.mxu0 0.0
      %788 = vmatprep.subr.mxu0 0.0
      %789 = vmatpush1.msra.mxu0 0.0
      %790 = vmatprep.subr.mxu0 0.0
      %791 = vmatpush1.msra.mxu0 0.0
      %792 = vmatprep.subr.mxu0 0.0
      %793 = vmatpush1.msra.mxu0 0.0
      %794 = vmatprep.subr.mxu0 0.0
      %795 = vmatpush1.msra.mxu0 0.0
      %796 = vmatprep.subr.mxu0 0.0
      %797 = vmatpush1.msra.mxu0 0.0
      %798 = vmatprep.subr.mxu0 0.0
      %799 = vmatpush1.msra.mxu0 0.0
      %800 = vmatprep.subr.mxu0 0.0
      %801 = vmatpush1.msra.mxu0 0.0
      %802 = vmatprep.subr.mxu0 0.0
      %803 = vmatpush1.msra.mxu0 0.0
      %804 = vmatprep.subr.mxu0 0.0
      %805 = vmatpush1.msra.mxu0 0.0
      %806 = vmatprep.subr.mxu0 0.0
      %807 = vmatpush1.msra.mxu0 0.0
      %808 = vmatprep.subr.mxu0 0.0
      %809 = vmatpush1.msra.mxu0 0.0
      %810 = vmatprep.mubr.f32.mxu0 0.0
      %811 = vmatmul.mubr.f32.gmra.mrb[0].mxu0 %v744
      %v812 = vpop.f32.mrb[0].mxu0
      %v813 = vadd.f32 0.0, %v812
      %v814 = vpop.f32.mrb[0].mxu0
      %815 = vdwg.mxu0
      %816 = vrot.lane.b32.xlu0 %v307, 104
      %v817 = vpop.permute.xlu0 %816
      %818 = vrot.lane.b32.xlu0 %v307, 72
      %v819 = vpop.permute.xlu0 %818
      %v820 = vsel %vm312, %v817, 0
      %v822 = vsel %vm312, %v819, 0
      %824 = vmatprep.subr.mxu0 0.0
      %825 = vmatpush1.xpose.msra.mxu0 %v822
      %826 = vmatprep.subr.mxu0 0.0
      %827 = vmatpush1.xpose.msra.mxu0 0.0
      %828 = vmatprep.subr.mxu0 0.0
      %829 = vmatpush1.xpose.msra.mxu0 0.0
      %830 = vmatprep.subr.mxu0 0.0
      %831 = vmatpush1.xpose.msra.mxu0 0.0
      %832 = vmatprep.subr.mxu0 0.0
      %833 = vmatpush1.xpose.msra.mxu0 0.0
      %834 = vmatprep.subr.mxu0 0.0
      %835 = vmatpush1.xpose.msra.mxu0 0.0
      %836 = vmatprep.subr.mxu0 0.0
      %837 = vmatpush1.xpose.msra.mxu0 0.0
      %838 = vmatprep.subr.mxu0 0.0
      %839 = vmatpush1.xpose.msra.mxu0 0.0
      %840 = vmatprep.subr.mxu0 0.0
      %841 = vmatpush1.xpose.msra.mxu0 0.0
      %842 = vmatprep.subr.mxu0 0.0
      %843 = vmatpush1.xpose.msra.mxu0 0.0
      %844 = vmatprep.subr.mxu0 0.0
      %845 = vmatpush1.xpose.msra.mxu0 0.0
      %846 = vmatprep.subr.mxu0 0.0
      %847 = vmatpush1.xpose.msra.mxu0 0.0
      %848 = vmatprep.subr.mxu0 0.0
      %849 = vmatpush1.xpose.msra.mxu0 0.0
      %850 = vmatprep.subr.mxu0 0.0
      %851 = vmatpush1.xpose.msra.mxu0 0.0
      %852 = vmatprep.subr.mxu0 0.0
      %853 = vmatpush1.xpose.msra.mxu0 0.0
      %854 = vmatprep.subr.mxu0 0.0
      %855 = vmatpush1.xpose.msra.mxu0 0.0
      %856 = vmatprep.subr.mxu0 0.0
      %857 = vmatpush1.xpose.msra.mxu0 0.0
      %858 = vmatprep.subr.mxu0 0.0
      %859 = vmatpush1.xpose.msra.mxu0 0.0
      %860 = vmatprep.subr.mxu0 0.0
      %861 = vmatpush1.xpose.msra.mxu0 0.0
      %862 = vmatprep.subr.mxu0 0.0
      %863 = vmatpush1.xpose.msra.mxu0 0.0
      %864 = vmatprep.subr.mxu0 0.0
      %865 = vmatpush1.xpose.msra.mxu0 0.0
      %866 = vmatprep.subr.mxu0 0.0
      %867 = vmatpush1.xpose.msra.mxu0 0.0
      %868 = vmatprep.subr.mxu0 0.0
      %869 = vmatpush1.xpose.msra.mxu0 0.0
      %870 = vmatprep.subr.mxu0 0.0
      %871 = vmatpush1.xpose.msra.mxu0 0.0
      %872 = vmatprep.subr.mxu0 0.0
      %873 = vmatpush1.xpose.msra.mxu0 0.0
      %874 = vmatprep.subr.mxu0 0.0
      %875 = vmatpush1.xpose.msra.mxu0 0.0
      %876 = vmatprep.subr.mxu0 0.0
      %877 = vmatpush1.xpose.msra.mxu0 0.0
      %878 = vmatprep.subr.mxu0 0.0
      %879 = vmatpush1.xpose.msra.mxu0 0.0
      %880 = vmatprep.subr.mxu0 0.0
      %881 = vmatpush1.xpose.msra.mxu0 0.0
      %882 = vmatprep.subr.mxu0 0.0
      %883 = vmatpush1.xpose.msra.mxu0 0.0
      %884 = vmatprep.subr.mxu0 0.0
      %885 = vmatpush1.xpose.msra.mxu0 0.0
      %886 = vmatprep.subr.mxu0 0.0
      %887 = vmatpush1.xpose.msra.mxu0 0.0
      %888 = vmatprep.mubr.f32.mxu0 0.0
      %889 = vmatmul.mubr.f32.gmra.mrb[0].mxu0 %v820
      %v890 = vpop.f32.mrb[0].mxu0
      %v891 = vadd.f32 0.0, %v890
      %v892 = vpop.f32.mrb[0].mxu0
      %893 = vdwg.mxu0
      %v894 = vmul.f32 %v891, 0.35355338
      %v895 = vadd.f32 %v894, %v392
      %v896 = vsel %vm312, %v895, -inf
      %897 = vmax.xlane.f32.xlu0 %v896
      %v898 = vpop.xlane.xlu0 %897
      %v899 = vsub.f32 %v895, %v898
      %v900 = vmul.f32 %v899, 1.442695
      %v901 = vpow.pop %v900
      %v902 = vsel %vm312, %v901, 0.0
      %903 = vadd.xlane.f32.xlu0 %v902
      %v904 = vpop.xlane.xlu0 %903
      %v905 = vrcp.pop %v904
      %v906 = vmul.f32 %v901, %v905
      %907 = vrot.lane.b32.xlu0 %v307, 40
      %v908 = vpop.permute.xlu0 %907
      %v911 = vsel %vm312, %v906, 0
      %913 = vmatprep.subr.mxu0 0.0
      %914 = vmatpush1.msra.mxu0 %v908
      %915 = vmatprep.subr.mxu0 0.0
      %916 = vmatpush1.msra.mxu0 0.0
      %917 = vmatprep.subr.mxu0 0.0
      %918 = vmatpush1.msra.mxu0 0.0
      %919 = vmatprep.subr.mxu0 0.0
      %920 = vmatpush1.msra.mxu0 0.0
      %921 = vmatprep.subr.mxu0 0.0
      %922 = vmatpush1.msra.mxu0 0.0
      %923 = vmatprep.subr.mxu0 0.0
      %924 = vmatpush1.msra.mxu0 0.0
      %925 = vmatprep.subr.mxu0 0.0
      %926 = vmatpush1.msra.mxu0 0.0
      %927 = vmatprep.subr.mxu0 0.0
      %928 = vmatpush1.msra.mxu0 0.0
      %929 = vmatprep.subr.mxu0 0.0
      %930 = vmatpush1.msra.mxu0 0.0
      %931 = vmatprep.subr.mxu0 0.0
      %932 = vmatpush1.msra.mxu0 0.0
      %933 = vmatprep.subr.mxu0 0.0
      %934 = vmatpush1.msra.mxu0 0.0
      %935 = vmatprep.subr.mxu0 0.0
      %936 = vmatpush1.msra.mxu0 0.0
      %937 = vmatprep.subr.mxu0 0.0
      %938 = vmatpush1.msra.mxu0 0.0
      %939 = vmatprep.subr.mxu0 0.0
      %940 = vmatpush1.msra.mxu0 0.0
      %941 = vmatprep.subr.mxu0 0.0
      %942 = vmatpush1.msra.mxu0 0.0
      %943 = vmatprep.subr.mxu0 0.0
      %944 = vmatpush1.msra.mxu0 0.0
      %945 = vmatprep.subr.mxu0 0.0
      %946 = vmatpush1.msra.mxu0 0.0
      %947 = vmatprep.subr.mxu0 0.0
      %948 = vmatpush1.msra.mxu0 0.0
      %949 = vmatprep.subr.mxu0 0.0
      %950 = vmatpush1.msra.mxu0 0.0
      %951 = vmatprep.subr.mxu0 0.0
      %952 = vmatpush1.msra.mxu0 0.0
      %953 = vmatprep.subr.mxu0 0.0
      %954 = vmatpush1.msra.mxu0 0.0
      %955 = vmatprep.subr.mxu0 0.0
      %956 = vmatpush1.msra.mxu0 0.0
      %957 = vmatprep.subr.mxu0 0.0
      %958 = vmatpush1.msra.mxu0 0.0
      %959 = vmatprep.subr.mxu0 0.0
      %960 = vmatpush1.msra.mxu0 0.0
      %961 = vmatprep.subr.mxu0 0.0
      %962 = vmatpush1.msra.mxu0 0.0
      %963 = vmatprep.subr.mxu0 0.0
      %964 = vmatpush1.msra.mxu0 0.0
      %965 = vmatprep.subr.mxu0 0.0
      %966 = vmatpush1.msra.mxu0 0.0
      %967 = vmatprep.subr.mxu0 0.0
      %968 = vmatpush1.msra.mxu0 0.0
      %969 = vmatprep.subr.mxu0 0.0
      %970 = vmatpush1.msra.mxu0 0.0
      %971 = vmatprep.subr.mxu0 0.0
      %972 = vmatpush1.msra.mxu0 0.0
      %973 = vmatprep.subr.mxu0 0.0
      %974 = vmatpush1.msra.mxu0 0.0
      %975 = vmatprep.subr.mxu0 0.0
      %976 = vmatpush1.msra.mxu0 0.0
      %977 = vmatprep.mubr.f32.mxu0 0.0
      %978 = vmatmul.mubr.f32.gmra.mrb[0].mxu0 %v911
      %v979 = vpop.f32.mrb[0].mxu0
      %v980 = vadd.f32 0.0, %v979
      %v981 = vpop.f32.mrb[0].mxu0
      %982 = vdwg.mxu0
      %984 = vrot.lane.b32.xlu0 %v646, 8
      %v985 = vpop.permute.xlu0 %984
      %988 = vrot.lane.b32.xlu0 %v813, 16
      %v989 = vpop.permute.xlu0 %988
      %992 = vrot.lane.b32.xlu0 %v980, 24
      %v993 = vpop.permute.xlu0 %992
      %v995 = vsel %vm312, %v479, %v985
      %vm996 = vcmask 130048
      %v997 = vsel %vm996, %v995, %v989
      %vm998 = vcmask 195584
      %v999 = vsel %vm998, %v997, %v993
      %v1000 = vpack.c.bf16 %v999, %v999
      %v1001 = vld [vmem:[%s3] sm:$0xf]
      %v1002 = vld [vmem:[%s3 + $0x4] sm:$0xf]
      %v1003 = vld [vmem:[%s3 + $0x8] sm:$0xf]
      %v1004 = vld [vmem:[%s3 + $0xc] sm:$0xf]
      %v1005 = vld [vmem:[%s4] sm:$0x1]
      %v1007 = vlaneseq
      %v1008 = vshrl.u32 %v1007, 7
      %v1009 = vsub.s32 0, %v1008
      %v1010 = vrot.slane %v1005, %v1009
      %v1016 = vunpack.c.l.b16 %v1001
      %v1017 = vunpack.c.l.b16 %v1002
      %v1018 = vunpack.c.l.b16 %v1003
      %v1019 = vunpack.c.l.b16 %v1004
      %v1020 = vpack.c.b16 %v1017, %v1016
      %v1021 = vpack.c.b16 %v1019, %v1018
      %vm1024 = vcmask 261120
      %v1026 = vsel %vm1024, %v1000, 0
      %1028 = vmatprep.subr.bf16.mxu0 0
      %1029 = vmatpush1.bf16.msra.mxu0 %v1020
      %1030 = vmatprep.subr.bf16.mxu0 0
      %1031 = vmatpush1.bf16.msra.mxu0 %v1021
      %1032 = vmatprep.subr.bf16.mxu0 0
      %1033 = vmatpush1.bf16.msra.mxu0 0
      %1034 = vmatprep.subr.bf16.mxu0 0
      %1035 = vmatpush1.bf16.msra.mxu0 0
      %1036 = vmatprep.subr.bf16.mxu0 0
      %1037 = vmatpush1.bf16.msra.mxu0 0
      %1038 = vmatprep.subr.bf16.mxu0 0
      %1039 = vmatpush1.bf16.msra.mxu0 0
      %1040 = vmatprep.subr.bf16.mxu0 0
      %1041 = vmatpush1.bf16.msra.mxu0 0
      %1042 = vmatprep.subr.bf16.mxu0 0
      %1043 = vmatpush1.bf16.msra.mxu0 0
      %1044 = vmatprep.subr.bf16.mxu0 0
      %1045 = vmatpush1.bf16.msra.mxu0 0
      %1046 = vmatprep.subr.bf16.mxu0 0
      %1047 = vmatpush1.bf16.msra.mxu0 0
      %1048 = vmatprep.subr.bf16.mxu0 0
      %1049 = vmatpush1.bf16.msra.mxu0 0
      %1050 = vmatprep.subr.bf16.mxu0 0
      %1051 = vmatpush1.bf16.msra.mxu0 0
      %1052 = vmatprep.subr.bf16.mxu0 0
      %1053 = vmatpush1.bf16.msra.mxu0 0
      %1054 = vmatprep.subr.bf16.mxu0 0
      %1055 = vmatpush1.bf16.msra.mxu0 0
      %1056 = vmatprep.subr.bf16.mxu0 0
      %1057 = vmatpush1.bf16.msra.mxu0 0
      %1058 = vmatprep.subr.bf16.mxu0 0
      %1059 = vmatpush1.bf16.msra.mxu0 0
      %1060 = vmatprep.mubr.bf16.mxu0 0
      %1061 = vmatmul.mubr.bf16.gmra.mrb[0].mxu0 %v1026
      %v1062 = vpop.f32.mrb[0].mxu0
      %v1063 = vadd.f32 %v1010, %v1062
      %v1064 = vpop.f32.mrb[0].mxu0
      %v1065 = vpop.f32.mrb[0].mxu0
      %v1066 = vpop.f32.mrb[0].mxu0
      %1067 = vdwg.mxu0
      %v1068 = vld [vmem:[%s300] sm:$0xf]
      %v1069 = vunpack.c.l.bf16 %v1068
      %v1070 = vadd.f32 %v1069, %v1063
      %v1071 = vld [vmem:[%s5] sm:$0x1]
      %v1072 = vld [vmem:[%s6] sm:$0x1]
      %v1073 = vsel %vm1024, %v1070, 0.0
      %1074 = vadd.xlane.f32.xlu0 %v1073
      %v1075 = vpop.xlane.xlu0 %1074
      %v1076 = vrcp.pop 32.0
      %v1077 = vmul.f32 %v1075, %v1076
      %v1078 = vsub.f32 %v1070, %v1077
      %v1079 = vmul.f32 %v1078, %v1078
      %v1080 = vsel %vm1024, %v1079, 0.0
      %1081 = vadd.xlane.f32.xlu0 %v1080
      %v1082 = vpop.xlane.xlu0 %1081
      %v1083 = vmul.f32 %v1082, %v1076
      %v1084 = vadd.f32 %v1083, 1e-12
      %v1085 = vrsqrt.pop %v1084
      %v1086 = vmul.f32 %v1078, %v1085
      %v1088 = vlaneseq
      %v1089 = vshrl.u32 %v1088, 7
      %v1090 = vsub.s32 0, %v1089
      %v1091 = vrot.slane %v1071, %v1090
      %v1093 = vmul.f32 %v1086, %v1091
      %v1095 = vlaneseq
      %v1096 = vshrl.u32 %v1095, 7
      %v1097 = vsub.s32 0, %v1096
      %v1098 = vrot.slane %v1072, %v1097
      %v1100 = vadd.f32 %v1093, %v1098
      %v1101 = vpack.c.bf16 %v1100, %v1100
      %vm1102 = vcmask 257024
      %1103 = vst.msk [vmem:[%s304] sm:$0xf] %vm1102, %v1101
      %p1104 = scmp.lt.s32.totalorder %s18, 1
      %s1105 = scalar_select %p1104, %s18, 1
      %s1106 = smul.addr %s1105, 4
      %s1107 = scalar_lea.vmem %s7, %s1106
      // Predicated region
      $region49: #{pretrained_bert_forward.10} parent=47 // pred_check
        %p1108 = pneg %p198
      $region50: #{pretrained_bert_forward.10} parent=47 // pred_check_branch
        %1110 = sbr.rel (%p1108) target = $region52
      $region51: #{pretrained_bert_forward.10} parent=47 // pred_region
        _
      $region52: #{pretrained_bert_forward.10} parent=47 // pred_fallthru
        _
    $region48: #{pretrained_bert_forward.10} parent=5 // pred_fallthru
      _
    %p1111 = scmp.le.s32.totalorder 2, %s13
    // Predicated region
    $region53: #{pretrained_bert_forward.10} parent=5 // pred_check
      %p1112 = pneg %p1111
    $region54: #{pretrained_bert_forward.10} parent=5 // pred_check_branch
      %1114 = sbr.rel (%p1112) target = $region56
    $region55: #{pretrained_bert_forward.10} parent=5 // pred_region
      %s1115 = ssub.s32 %s13, 2
      // Predicated region
      $region57: #{pretrained_bert_forward.10} parent=55 // pred_check
        %p1116 = pneg %p204
      $region58: #{pretrained_bert_forward.10} parent=55 // pred_check_branch
        %1118 = sbr.rel (%p1116) target = $region60
      $region59: #{pretrained_bert_forward.10} parent=55 // pred_region
        %p1119 = scmp.lt.s32.totalorder %s19, 1
        %s1120 = scalar_select %p1119, %s19, 1
        %s1121 = smul.addr %s1120, 4
        %s1122 = scalar_lea.vmem %s7, %s1121
      $region60: #{pretrained_bert_forward.10} parent=55 // pred_fallthru
        _
    $region56: #{pretrained_bert_forward.10} parent=5 // pred_fallthru
      _
  $region6: #{pretrained_bert_forward.10} parent=0 // loop_footer
    %s17 = sadd.s32 1, %s13
  $region7: #{pretrained_bert_forward.10} parent=0 // loop_footer_branch
    %12 = sbr.rel target = $region3
  $region8: #{pretrained_bert_forward.10} parent=0 // loop_exit
    _

// kernel: pretrained_bert_forward.15
$region0: #{pretrained_bert_forward.15}
  #allocation0 [shape = 'u32[]', space=smem, size = 0x4, offset = 0x4, fixed_abs, tag = 'smem constant byte address 0x4 - core index']
  #allocation1 [shape = 'u32[144,128]{1,0:T(1,128)}', space=vmem, size = 0x12000, scoped, tag = 'internal scratch']
  %s0 = inlined_call_operand.vmem [shape: bf16[2,32], index: 0, kind: input, shape index: {}]
  %s1 = inlined_call_operand.vmem [shape: f32[32,32], index: 1, kind: input, shape index: {}]
  %s2 = inlined_call_operand.vmem [shape: f32[1,32], index: 2, kind: input, shape index: {}]
  %s3 = inlined_call_operand.vmem [shape: f32[32,16], index: 3, kind: input, shape index: {}]
  %s4 = inlined_call_operand.hbm [shape: f32[2,16], index: 4, kind: output, shape index: {}]
  %s5 = sld [smem:[#allocation0]]
  $region26: #{pretrained_bert_forward.15} parent=0
    _
  %s7 = ssub.s32 1, %s5
  %s8 = scalar_select 0, %s7, %s5
  $region1: #{pretrained_bert_forward.15} parent=0
    #allocation2 [shape = 'u8[1024]{0}', space=vmem, size = 0x400, scoped, tag = 'output window, operand 0, single buffered']
    #allocation3 [shape = 's32[1]{0}', space=sflag, size = 0x4, scoped, tag = 'scoped memory for pretrained_bert_forward.15']
    %9 = vsyncpa [#allocation3], 0
    // Predicated region
    $region2: #{pretrained_bert_forward.15} parent=1 // pred_check
      _
    $region3: #{pretrained_bert_forward.15} parent=1 // pred_check_branch
      %11 = sbr.rel (0) target = $region5
    $region4: #{pretrained_bert_forward.15} parent=1 // pred_region
      _
    $region5: #{pretrained_bert_forward.15} parent=1 // pred_fallthru
      _
    // Predicated region
    $region6: #{pretrained_bert_forward.15} parent=1 // pred_check
      _
    $region7: #{pretrained_bert_forward.15} parent=1 // pred_check_branch
      %13 = sbr.rel (0) target = $region9
    $region8: #{pretrained_bert_forward.15} parent=1 // pred_region
      _
    $region9: #{pretrained_bert_forward.15} parent=1 // pred_fallthru
      _
    // Predicated region
    $region10: #{pretrained_bert_forward.15} parent=1 // pred_check
      _
    $region11: #{pretrained_bert_forward.15} parent=1 // pred_check_branch
      %15 = sbr.rel (0) target = $region13
    $region12: #{pretrained_bert_forward.15} parent=1 // pred_region
      _
    $region13: #{pretrained_bert_forward.15} parent=1 // pred_fallthru
      _
    // Predicated region
    $region14: #{pretrained_bert_forward.15} parent=1 // pred_check
      _
    $region15: #{pretrained_bert_forward.15} parent=1 // pred_check_branch
      %17 = sbr.rel (0) target = $region17
    $region16: #{pretrained_bert_forward.15} parent=1 // pred_region
      _
    $region17: #{pretrained_bert_forward.15} parent=1 // pred_fallthru
      _
    %v18 = vld [vmem:[%s0] sm:$0x1]
    %v19 = vunpack.c.l.bf16 %v18
    %v20 = vld [vmem:[%s1] sm:$0xff]
    %v21 = vld [vmem:[%s1 + $0x8] sm:$0xff]
    %v22 = vld [vmem:[%s1 + $0x10] sm:$0xff]
    %v23 = vld [vmem:[%s1 + $0x18] sm:$0xff]
    %v24 = vld [vmem:[%s2] sm:$0x1]
    %v26 = vlaneseq
    %v27 = vshrl.u32 %v26, 7
    %v28 = vsub.s32 0, %v27
    %v29 = vrot.slane %v24, %v28
    %vm31 = vcmask 261120
    %v33 = vsel %vm31, %v19, 0
    %35 = vmatprep.subr.mxu0 0.0
    %36 = vmatpush1.msra.mxu0 %v20
    %37 = vmatprep.subr.mxu0 0.0
    %38 = vmatpush1.msra.mxu0 %v21
    %39 = vmatprep.subr.mxu0 0.0
    %40 = vmatpush1.msra.mxu0 %v22
    %41 = vmatprep.subr.mxu0 0.0
    %42 = vmatpush1.msra.mxu0 %v23
    %43 = vmatprep.subr.mxu0 0.0
    %44 = vmatpush1.msra.mxu0 0.0
    %45 = vmatprep.subr.mxu0 0.0
    %46 = vmatpush1.msra.mxu0 0.0
    %47 = vmatprep.subr.mxu0 0.0
    %48 = vmatpush1.msra.mxu0 0.0
    %49 = vmatprep.subr.mxu0 0.0
    %50 = vmatpush1.msra.mxu0 0.0
    %51 = vmatprep.subr.mxu0 0.0
    %52 = vmatpush1.msra.mxu0 0.0
    %53 = vmatprep.subr.mxu0 0.0
    %54 = vmatpush1.msra.mxu0 0.0
    %55 = vmatprep.subr.mxu0 0.0
    %56 = vmatpush1.msra.mxu0 0.0
    %57 = vmatprep.subr.mxu0 0.0
    %58 = vmatpush1.msra.mxu0 0.0
    %59 = vmatprep.subr.mxu0 0.0
    %60 = vmatpush1.msra.mxu0 0.0
    %61 = vmatprep.subr.mxu0 0.0
    %62 = vmatpush1.msra.mxu0 0.0
    %63 = vmatprep.subr.mxu0 0.0
    %64 = vmatpush1.msra.mxu0 0.0
    %65 = vmatprep.subr.mxu0 0.0
    %66 = vmatpush1.msra.mxu0 0.0
    %67 = vmatprep.subr.mxu0 0.0
    %68 = vmatpush1.msra.mxu0 0.0
    %69 = vmatprep.subr.mxu0 0.0
    %70 = vmatpush1.msra.mxu0 0.0
    %71 = vmatprep.subr.mxu0 0.0
    %72 = vmatpush1.msra.mxu0 0.0
    %73 = vmatprep.subr.mxu0 0.0
    %74 = vmatpush1.msra.mxu0 0.0
    %75 = vmatprep.subr.mxu0 0.0
    %76 = vmatpush1.msra.mxu0 0.0
    %77 = vmatprep.subr.mxu0 0.0
    %78 = vmatpush1.msra.mxu0 0.0
    %79 = vmatprep.subr.mxu0 0.0
    %80 = vmatpush1.msra.mxu0 0.0
    %81 = vmatprep.subr.mxu0 0.0
    %82 = vmatpush1.msra.mxu0 0.0
    %83 = vmatprep.subr.mxu0 0.0
    %84 = vmatpush1.msra.mxu0 0.0
    %85 = vmatprep.subr.mxu0 0.0
    %86 = vmatpush1.msra.mxu0 0.0
    %87 = vmatprep.subr.mxu0 0.0
    %88 = vmatpush1.msra.mxu0 0.0
    %89 = vmatprep.subr.mxu0 0.0
    %90 = vmatpush1.msra.mxu0 0.0
    %91 = vmatprep.subr.mxu0 0.0
    %92 = vmatpush1.msra.mxu0 0.0
    %93 = vmatprep.subr.mxu0 0.0
    %94 = vmatpush1.msra.mxu0 0.0
    %95 = vmatprep.subr.mxu0 0.0
    %96 = vmatpush1.msra.mxu0 0.0
    %97 = vmatprep.subr.mxu0 0.0
    %98 = vmatpush1.msra.mxu0 0.0
    %99 = vmatprep.mubr.f32.mxu0 0.0
    %100 = vmatmul.mubr.f32.gmra.mrb[0].mxu0 %v33
    %v101 = vpop.f32.mrb[0].mxu0
    %v102 = vadd.f32 %v29, %v101
    %v103 = vpop.f32.mrb[0].mxu0
    %104 = vdwg.mxu0
    %v105 = vtanh.pop %v102
    %v106 = vld [vmem:[%s3] sm:$0xff]
    %v107 = vld [vmem:[%s3 + $0x8] sm:$0xff]
    %v108 = vld [vmem:[%s3 + $0x10] sm:$0xff]
    %v109 = vld [vmem:[%s3 + $0x18] sm:$0xff]
    %v111 = vsel %vm31, %v105, 0
    %113 = vmatprep.subr.mxu0 0.0
    %114 = vmatpush1.msra.mxu0 %v106
    %115 = vmatprep.subr.mxu0 0.0
    %116 = vmatpush1.msra.mxu0 %v107
    %117 = vmatprep.subr.mxu0 0.0
    %118 = vmatpush1.msra.mxu0 %v108
    %119 = vmatprep.subr.mxu0 0.0
    %120 = vmatpush1.msra.mxu0 %v109
    %121 = vmatprep.subr.mxu0 0.0
    %122 = vmatpush1.msra.mxu0 0.0
    %123 = vmatprep.subr.mxu0 0.0
    %124 = vmatpush1.msra.mxu0 0.0
    %125 = vmatprep.subr.mxu0 0.0
    %126 = vmatpush1.msra.mxu0 0.0
    %127 = vmatprep.subr.mxu0 0.0
    %128 = vmatpush1.msra.mxu0 0.0
    %129 = vmatprep.subr.mxu0 0.0
    %130 = vmatpush1.msra.mxu0 0.0
    %131 = vmatprep.subr.mxu0 0.0
    %132 = vmatpush1.msra.mxu0 0.0
    %133 = vmatprep.subr.mxu0 0.0
    %134 = vmatpush1.msra.mxu0 0.0
    %135 = vmatprep.subr.mxu0 0.0
    %136 = vmatpush1.msra.mxu0 0.0
    %137 = vmatprep.subr.mxu0 0.0
    %138 = vmatpush1.msra.mxu0 0.0
    %139 = vmatprep.subr.mxu0 0.0
    %140 = vmatpush1.msra.mxu0 0.0
    %141 = vmatprep.subr.mxu0 0.0
    %142 = vmatpush1.msra.mxu0 0.0
    %143 = vmatprep.subr.mxu0 0.0
    %144 = vmatpush1.msra.mxu0 0.0
    %145 = vmatprep.subr.mxu0 0.0
    %146 = vmatpush1.msra.mxu0 0.0
    %147 = vmatprep.subr.mxu0 0.0
    %148 = vmatpush1.msra.mxu0 0.0
    %149 = vmatprep.subr.mxu0 0.0
    %150 = vmatpush1.msra.mxu0 0.0
    %151 = vmatprep.subr.mxu0 0.0
    %152 = vmatpush1.msra.mxu0 0.0
    %153 = vmatprep.subr.mxu0 0.0
    %154 = vmatpush1.msra.mxu0 0.0
    %155 = vmatprep.subr.mxu0 0.0
    %156 = vmatpush1.msra.mxu0 0.0
    %157 = vmatprep.subr.mxu0 0.0
    %158 = vmatpush1.msra.mxu0 0.0
    %159 = vmatprep.subr.mxu0 0.0
    %160 = vmatpush1.msra.mxu0 0.0
    %161 = vmatprep.subr.mxu0 0.0
    %162 = vmatpush1.msra.mxu0 0.0
    %163 = vmatprep.subr.mxu0 0.0
    %164 = vmatpush1.msra.mxu0 0.0
    %165 = vmatprep.subr.mxu0 0.0
    %166 = vmatpush1.msra.mxu0 0.0
    %167 = vmatprep.subr.mxu0 0.0
    %168 = vmatpush1.msra.mxu0 0.0
    %169 = vmatprep.subr.mxu0 0.0
    %170 = vmatpush1.msra.mxu0 0.0
    %171 = vmatprep.subr.mxu0 0.0
    %172 = vmatpush1.msra.mxu0 0.0
    %173 = vmatprep.subr.mxu0 0.0
    %174 = vmatpush1.msra.mxu0 0.0
    %175 = vmatprep.subr.mxu0 0.0
    %176 = vmatpush1.msra.mxu0 0.0
    %177 = vmatprep.mubr.f32.mxu0 0.0
    %178 = vmatmul.mubr.f32.gmra.mrb[0].mxu0 %v111
    %v179 = vpop.f32.mrb[0].mxu0
    %v180 = vadd.f32 0.0, %v179
    %v181 = vpop.f32.mrb[0].mxu0
    %182 = vdwg.mxu0
    %v183 = vmul.f32 %v180, %v180
    %vm184 = vcmask 123904
    %v185 = vsel %vm184, %v183, 0.0
    %186 = vadd.xlane.f32.xlu0 %v185
    %v187 = vpop.xlane.xlu0 %186
    %v188 = vrsqrt.pop %v187
    %v189 = vmul.f32 %v187, %v188
    %vm190 = vcmp.eq.f32.partialorder %v187, inf
    %v191 = vsel %vm190, %v187, %v189
    %vm192 = vcmp.eq.f32.partialorder %v187, 0.0
    %v193 = vand.u32 %v187, 2147483648
    %v194 = vsel %vm192, %v193, %v191
    %v195 = vmax.f32 %v194, 1e-12
    %v196 = vrcp.pop %v195
    %v197 = vmul.f32 %v180, %v196
    %198 = vst.msk [vmem:[#allocation2] sm:$0x3] %vm184, %v197
    // Predicated region
    $region18: #{pretrained_bert_forward.15} parent=1 // pred_check
      _
    $region19: #{pretrained_bert_forward.15} parent=1 // pred_check_branch
      %200 = sbr.rel (0) target = $region21
    $region20: #{pretrained_bert_forward.15} parent=1 // pred_region
      %s202 = ssub.s32 32, 32
      %203 = vsyncadd [#allocation3], %s202
      %s205 = sshll.u32 [#allocation2], 4
      %s206 = int_to_ptr.vmem [resolvable:$true] %s205
      %208 = dma.vmem_to_hbm [thread:$0]  %s206, 32, %s4, [#allocation3]
    $region21: #{pretrained_bert_forward.15} parent=1 // pred_fallthru
      _
    // Predicated region
    $region22: #{pretrained_bert_forward.15} parent=1 // pred_check
      _
    $region23: #{pretrained_bert_forward.15} parent=1 // pred_check_branch
      %210 = sbr.rel (0) target = $region25
    $region24: #{pretrained_bert_forward.15} parent=1 // pred_region
      %211 = dma.done [#allocation3], 32
    $region25: #{pretrained_bert_forward.15} parent=1 // pred_fallthru
      _
    %212 = vsyncpa [#allocation3], 1

</llo_original>
